<compile_context>
chip_gen: v7x
topology: tpu7x:2x2x1
jax: 0.10.0
libtpu: 0.0.40
codegen_flags: <defaults>
</compile_context>

<pallas_src>
import math

import jax
import jax.numpy as jnp
from jax import lax
from jax.experimental import pallas as pl
from jax.experimental.pallas import tpu as pltpu


# ----------------------------- config ---------------------------------------
class Config:
    d_hidn = 32
    n_head = 4
    d_head = 8
    dropout = 0.1  # unused at eval time


# ----------------------------- fused MHA kernel ------------------------------
def _make_mha_kernel(n_head, d_head, scale):
    def _mha_kernel(q_ref, k_ref, v_ref, m_ref,
                    wq_ref, bq_ref, wk_ref, bk_ref, wv_ref, bv_ref,
                    wo_ref, bo_ref,
                    out_ref, prob_ref):
        # Per grid step b: one batch element, all heads.
        q_in = q_ref[0]        # (S, d_hidn)
        k_in = k_ref[0]        # (S, d_hidn)
        v_in = v_ref[0]        # (S, d_hidn)
        mask = m_ref[0]        # (S, S) int32, nonzero => masked

        # Fused Q/K/V projections; everything stays in VMEM / vregs.
        # Scale is applied to Q (S, H*dh) instead of to scores (S, S).
        q_p = (jnp.dot(q_in, wq_ref[...], preferred_element_type=jnp.float32)
               + bq_ref[...]) * jnp.float32(scale)
        k_p = jnp.dot(k_in, wk_ref[...], preferred_element_type=jnp.float32) + bk_ref[...]
        v_p = jnp.dot(v_in, wv_ref[...], preferred_element_type=jnp.float32) + bv_ref[...]

        masked = mask != 0
        wo = wo_ref[...]                       # (H*dh, d_hidn) loaded once

        S = q_in.shape[0]
        d_hidn = wo.shape[1]
        out_acc = jnp.zeros((S, d_hidn), jnp.float32)

        # Static unroll over the (tiny) head count; one grid step handles all heads.
        for h in range(n_head):
            lo = h * d_head
            qh = q_p[:, lo:lo + d_head]        # (S, dh)
            kh = k_p[:, lo:lo + d_head]        # (S, dh)
            vh = v_p[:, lo:lo + d_head]        # (S, dh)

            # Q @ K^T without an explicit transpose: contract the feature dims.
            scores = lax.dot_general(
                qh, kh, (((1,), (1,)), ((), ())),
                preferred_element_type=jnp.float32)            # (S, S)
            scores = jnp.where(masked, jnp.float32(-1e9), scores)

            # Numerically stable softmax; reciprocal on the EUP slot.
            m_max = jnp.max(scores, axis=-1, keepdims=True)
            e = jnp.exp(scores - m_max)
            p = e * pl.reciprocal(jnp.sum(e, axis=-1, keepdims=True), approx=True)

            prob_ref[0, h] = p                                  # (S, S)

            ctx_h = jnp.dot(p, vh, preferred_element_type=jnp.float32)   # (S, dh)
            # Output projection folded per head: ctx @ W_O == sum_h ctx_h @ W_O[h]
            out_acc = out_acc + jnp.dot(
                ctx_h, wo[lo:lo + d_head, :],
                preferred_element_type=jnp.float32)

        out_ref[0] = out_acc + bo_ref[...]

    return _mha_kernel


def mha_forward_pallas(params, cfg, Q, K, V, attn_mask):
    """Q, K, V: (B, S, d_hidn) f32; attn_mask: (B, S, S) bool (True => masked).

    Returns (output (B, S, d_hidn), attn_prob (B, n_head, S, S))."""
    B, S, d_hidn = Q.shape
    H, dh = cfg.n_head, cfg.d_head
    d_proj = H * dh
    scale = 1.0 / math.sqrt(cfg.d_head)

    wq, bq = params["W_Q"]
    wk, bk = params["W_K"]
    wv, bv = params["W_V"]
    wo, bo = params["linear"]

    mask_i32 = attn_mask.astype(jnp.int32)
    bq2 = bq.reshape(1, d_proj)
    bk2 = bk.reshape(1, d_proj)
    bv2 = bv.reshape(1, d_proj)
    bo2 = bo.reshape(1, d_hidn)

    qkv_spec = pl.BlockSpec((1, S, d_hidn), lambda b: (b, 0, 0))
    mask_spec = pl.BlockSpec((1, S, S), lambda b: (b, 0, 0))
    w_in_spec = pl.BlockSpec((d_hidn, d_proj), lambda b: (0, 0))
    b_in_spec = pl.BlockSpec((1, d_proj), lambda b: (0, 0))
    w_out_spec = pl.BlockSpec((d_proj, d_hidn), lambda b: (0, 0))
    b_out_spec = pl.BlockSpec((1, d_hidn), lambda b: (0, 0))

    out_spec = pl.BlockSpec((1, S, d_hidn), lambda b: (b, 0, 0))
    prob_spec = pl.BlockSpec((1, H, S, S), lambda b: (b, 0, 0, 0))

    output, attn_prob = pl.pallas_call(
        _make_mha_kernel(H, dh, scale),
        out_shape=(
            jax.ShapeDtypeStruct((B, S, d_hidn), jnp.float32),
            jax.ShapeDtypeStruct((B, H, S, S), jnp.float32),
        ),
        grid_spec=pltpu.PrefetchScalarGridSpec(
            num_scalar_prefetch=0,
            grid=(B,),
            in_specs=[qkv_spec, qkv_spec, qkv_spec, mask_spec,
                      w_in_spec, b_in_spec,
                      w_in_spec, b_in_spec,
                      w_in_spec, b_in_spec,
                      w_out_spec, b_out_spec],
            out_specs=(out_spec, prob_spec),
        ),
        compiler_params=pltpu.CompilerParams(
            dimension_semantics=("parallel",)),
    )(Q, K, V, mask_i32, wq, bq2, wk, bk2, wv, bv2, wo, bo2)

    # dropout (eval mode) == identity
    return output, attn_prob


# ----------------------------- params ----------------------------------------
def init_params(key, cfg):
    d_hidn, n_head, d_head = cfg.d_hidn, cfg.n_head, cfg.d_head
    d_proj = n_head * d_head
    keys = jax.random.split(key, 8)

    def lin_init(kw, kb, d_in, d_out):
        # mimic PyTorch nn.Linear default init bounds (uniform +-1/sqrt(d_in))
        bound = 1.0 / math.sqrt(d_in)
        w = jax.random.uniform(kw, (d_in, d_out), jnp.float32, -bound, bound)
        b = jax.random.uniform(kb, (d_out,), jnp.float32, -bound, bound)
        return w, b

    params = {}
    params["W_Q"] = lin_init(keys[0], keys[1], d_hidn, d_proj)
    params["W_K"] = lin_init(keys[2], keys[3], d_hidn, d_proj)
    params["W_V"] = lin_init(keys[4], keys[5], d_hidn, d_proj)
    params["linear"] = lin_init(keys[6], keys[7], d_proj, d_hidn)
    return params


# ----------------------------- main -------------------------------------------
if __name__ == "__main__":
    cfg = Config()
    B, S = 2, 8

    key = jax.random.PRNGKey(0)
    k_params, k_q, k_k, k_v = jax.random.split(key, 4)

    params = init_params(k_params, cfg)

    Q = jax.random.normal(k_q, (B, S, cfg.d_hidn), jnp.float32)
    K = jax.random.normal(k_k, (B, S, cfg.d_hidn), jnp.float32)
    V = jax.random.normal(k_v, (B, S, cfg.d_hidn), jnp.float32)

    # causal-ish mask example: mask out future positions (True => masked)
    causal = jnp.triu(jnp.ones((S, S), dtype=jnp.bool_), k=1)
    attn_mask = jnp.broadcast_to(causal, (B, S, S))

    output, attn_prob = mha_forward_pallas(params, cfg, Q, K, V, attn_mask)
    jax.block_until_ready(output)
    jax.block_until_ready(attn_prob)

    assert output.shape == (B, S, cfg.d_hidn)
    assert attn_prob.shape == (B, cfg.n_head, S, S)
    print("KERNEL_OK")
</pallas_src>

<mosaic_0001>
module attributes {stable_mosaic.version = 11 : i64} {
  func.func @_mha_kernel(%arg0: i32, %arg1: memref<1x8x32xf32, #tpu.memory_space<vmem>>, %arg2: memref<1x8x32xf32, #tpu.memory_space<vmem>>, %arg3: memref<1x8x32xf32, #tpu.memory_space<vmem>>, %arg4: memref<1x8x8xi32, #tpu.memory_space<vmem>>, %arg5: memref<32x32xf32, #tpu.memory_space<vmem>>, %arg6: memref<1x32xf32, #tpu.memory_space<vmem>>, %arg7: memref<32x32xf32, #tpu.memory_space<vmem>>, %arg8: memref<1x32xf32, #tpu.memory_space<vmem>>, %arg9: memref<32x32xf32, #tpu.memory_space<vmem>>, %arg10: memref<1x32xf32, #tpu.memory_space<vmem>>, %arg11: memref<32x32xf32, #tpu.memory_space<vmem>>, %arg12: memref<1x32xf32, #tpu.memory_space<vmem>>, %arg13: memref<1x8x32xf32, #tpu.memory_space<vmem>>, %arg14: memref<1x4x8x8xf32, #tpu.memory_space<vmem>>) attributes {dimension_semantics = [#tpu.dimension_semantics<parallel>], iteration_bounds = array<i64: 2>, scalar_prefetch = 0 : i64, scratch_operands = 0 : i64, tpu.core_type = #tpu.core_type<tc>, window_params = [{transform_indices = @transform_0, window_bounds = array<i64: 1, 8, 32>}, {transform_indices = @transform_1, window_bounds = array<i64: 1, 8, 32>}, {transform_indices = @transform_2, window_bounds = array<i64: 1, 8, 32>}, {transform_indices = @transform_3, window_bounds = array<i64: 1, 8, 8>}, {pipeline_mode = #tpu.pipeline_mode<synchronous>, transform_indices = @transform_4, window_bounds = array<i64: 32, 32>}, {pipeline_mode = #tpu.pipeline_mode<synchronous>, transform_indices = @transform_5, window_bounds = array<i64: 1, 32>}, {pipeline_mode = #tpu.pipeline_mode<synchronous>, transform_indices = @transform_6, window_bounds = array<i64: 32, 32>}, {pipeline_mode = #tpu.pipeline_mode<synchronous>, transform_indices = @transform_7, window_bounds = array<i64: 1, 32>}, {pipeline_mode = #tpu.pipeline_mode<synchronous>, transform_indices = @transform_8, window_bounds = array<i64: 32, 32>}, {pipeline_mode = #tpu.pipeline_mode<synchronous>, transform_indices = @transform_9, window_bounds = array<i64: 1, 32>}, {pipeline_mode = #tpu.pipeline_mode<synchronous>, transform_indices = @transform_10, window_bounds = array<i64: 32, 32>}, {pipeline_mode = #tpu.pipeline_mode<synchronous>, transform_indices = @transform_11, window_bounds = array<i64: 1, 32>}, {transform_indices = @transform_12, window_bounds = array<i64: 1, 8, 32>}, {transform_indices = @transform_13, window_bounds = array<i64: 1, 4, 8, 8>}]} {
    %c0 = arith.constant 0 : index
    %c0_0 = arith.constant 0 : index
    %c0_1 = arith.constant 0 : index
    %0 = vector.load %arg1[%c0, %c0_0, %c0_1] : memref<1x8x32xf32, #tpu.memory_space<vmem>>, vector<1x8x32xf32>
    %1 = vector.shape_cast %0 : vector<1x8x32xf32> to vector<8x32xf32>
    %c0_2 = arith.constant 0 : index
    %c0_3 = arith.constant 0 : index
    %c0_4 = arith.constant 0 : index
    %2 = vector.load %arg2[%c0_2, %c0_3, %c0_4] : memref<1x8x32xf32, #tpu.memory_space<vmem>>, vector<1x8x32xf32>
    %3 = vector.shape_cast %2 : vector<1x8x32xf32> to vector<8x32xf32>
    %c0_5 = arith.constant 0 : index
    %c0_6 = arith.constant 0 : index
    %c0_7 = arith.constant 0 : index
    %4 = vector.load %arg3[%c0_5, %c0_6, %c0_7] : memref<1x8x32xf32, #tpu.memory_space<vmem>>, vector<1x8x32xf32>
    %5 = vector.shape_cast %4 : vector<1x8x32xf32> to vector<8x32xf32>
    %c0_8 = arith.constant 0 : index
    %c0_9 = arith.constant 0 : index
    %c0_10 = arith.constant 0 : index
    %6 = vector.load %arg4[%c0_8, %c0_9, %c0_10] : memref<1x8x8xi32, #tpu.memory_space<vmem>>, vector<1x8x8xi32>
    %7 = vector.shape_cast %6 : vector<1x8x8xi32> to vector<8x8xi32>
    %c0_11 = arith.constant 0 : index
    %c0_12 = arith.constant 0 : index
    %8 = vector.load %arg5[%c0_11, %c0_12] : memref<32x32xf32, #tpu.memory_space<vmem>>, vector<32x32xf32>
    %cst = arith.constant dense<0.000000e+00> : vector<8x32xf32>
    %9 = tpu.matmul %1, %8, %cst {dimension_numbers = #tpu.dot_dimension_numbers<[1], [0], [0], [1], [0, 0, 1, 1], [], []>} : vector<8x32xf32>, vector<32x32xf32>, vector<8x32xf32> -> vector<8x32xf32>
    %c0_13 = arith.constant 0 : index
    %c0_14 = arith.constant 0 : index
    %10 = vector.load %arg6[%c0_13, %c0_14] : memref<1x32xf32, #tpu.memory_space<vmem>>, vector<1x32xf32>
    %11 = vector.broadcast %10 : vector<1x32xf32> to vector<8x32xf32>
    %12 = arith.addf %9, %11 : vector<8x32xf32>
    %cst_15 = arith.constant 0.353553385 : f32
    %13 = vector.broadcast %cst_15 : f32 to vector<8x32xf32>
    %14 = arith.mulf %12, %13 : vector<8x32xf32>
    %c0_16 = arith.constant 0 : index
    %c0_17 = arith.constant 0 : index
    %15 = vector.load %arg7[%c0_16, %c0_17] : memref<32x32xf32, #tpu.memory_space<vmem>>, vector<32x32xf32>
    %cst_18 = arith.constant dense<0.000000e+00> : vector<8x32xf32>
    %16 = tpu.matmul %3, %15, %cst_18 {dimension_numbers = #tpu.dot_dimension_numbers<[1], [0], [0], [1], [0, 0, 1, 1], [], []>} : vector<8x32xf32>, vector<32x32xf32>, vector<8x32xf32> -> vector<8x32xf32>
    %c0_19 = arith.constant 0 : index
    %c0_20 = arith.constant 0 : index
    %17 = vector.load %arg8[%c0_19, %c0_20] : memref<1x32xf32, #tpu.memory_space<vmem>>, vector<1x32xf32>
    %18 = vector.broadcast %17 : vector<1x32xf32> to vector<8x32xf32>
    %19 = arith.addf %16, %18 : vector<8x32xf32>
    %c0_21 = arith.constant 0 : index
    %c0_22 = arith.constant 0 : index
    %20 = vector.load %arg9[%c0_21, %c0_22] : memref<32x32xf32, #tpu.memory_space<vmem>>, vector<32x32xf32>
    %cst_23 = arith.constant dense<0.000000e+00> : vector<8x32xf32>
    %21 = tpu.matmul %5, %20, %cst_23 {dimension_numbers = #tpu.dot_dimension_numbers<[1], [0], [0], [1], [0, 0, 1, 1], [], []>} : vector<8x32xf32>, vector<32x32xf32>, vector<8x32xf32> -> vector<8x32xf32>
    %c0_24 = arith.constant 0 : index
    %c0_25 = arith.constant 0 : index
    %22 = vector.load %arg10[%c0_24, %c0_25] : memref<1x32xf32, #tpu.memory_space<vmem>>, vector<1x32xf32>
    %23 = vector.broadcast %22 : vector<1x32xf32> to vector<8x32xf32>
    %24 = arith.addf %21, %23 : vector<8x32xf32>
    %c0_i32 = arith.constant 0 : i32
    %25 = vector.broadcast %c0_i32 : i32 to vector<8x8xi32>
    %26 = arith.cmpi ne, %7, %25 : vector<8x8xi32>
    %c0_26 = arith.constant 0 : index
    %c0_27 = arith.constant 0 : index
    %27 = vector.load %arg11[%c0_26, %c0_27] : memref<32x32xf32, #tpu.memory_space<vmem>>, vector<32x32xf32>
    %cst_28 = arith.constant 0.000000e+00 : f32
    %28 = vector.broadcast %cst_28 : f32 to vector<8x32xf32>
    %29 = vector.extract_strided_slice %14 {offsets = [0, 0], sizes = [8, 8], strides = [1, 1]} : vector<8x32xf32> to vector<8x8xf32>
    %30 = vector.extract_strided_slice %19 {offsets = [0, 0], sizes = [8, 8], strides = [1, 1]} : vector<8x32xf32> to vector<8x8xf32>
    %31 = vector.extract_strided_slice %24 {offsets = [0, 0], sizes = [8, 8], strides = [1, 1]} : vector<8x32xf32> to vector<8x8xf32>
    %cst_29 = arith.constant dense<0.000000e+00> : vector<8x8xf32>
    %32 = tpu.matmul %29, %30, %cst_29 {dimension_numbers = #tpu.dot_dimension_numbers<[1], [1], [0], [0], [0, 0, 1, 0], [], []>} : vector<8x8xf32>, vector<8x8xf32>, vector<8x8xf32> -> vector<8x8xf32>
    %cst_30 = arith.constant -1.000000e+09 : f32
    %33 = vector.broadcast %cst_30 : f32 to vector<8x8xf32>
    %34 = arith.select %26, %33, %32 : vector<8x8xi1>, vector<8x8xf32>
    %cst_31 = arith.constant dense<0xFF800000> : vector<8xf32>
    %35 = vector.multi_reduction <maximumf>, %34, %cst_31 [1] : vector<8x8xf32> to vector<8xf32>
    %36 = vector.shape_cast %35 : vector<8xf32> to vector<8x1xf32>
    %37 = vector.broadcast %36 : vector<8x1xf32> to vector<8x8xf32>
    %38 = arith.subf %34, %37 : vector<8x8xf32>
    %39 = math.exp %38 : vector<8x8xf32>
    %cst_32 = arith.constant dense<0.000000e+00> : vector<8xf32>
    %40 = vector.multi_reduction <add>, %39, %cst_32 [1] : vector<8x8xf32> to vector<8xf32>
    %41 = vector.shape_cast %40 : vector<8xf32> to vector<8x1xf32>
    %42 = tpu.reciprocal %41 {approx = true} : vector<8x1xf32> -> vector<8x1xf32>
    %43 = vector.broadcast %42 : vector<8x1xf32> to vector<8x8xf32>
    %44 = arith.mulf %39, %43 : vector<8x8xf32>
    %c0_33 = arith.constant 0 : index
    %c0_34 = arith.constant 0 : index
    %c0_35 = arith.constant 0 : index
    %c0_36 = arith.constant 0 : index
    %45 = vector.load %arg14[%c0_33, %c0_34, %c0_35, %c0_36] : memref<1x4x8x8xf32, #tpu.memory_space<vmem>>, vector<1x1x8x8xf32>
    %46 = vector.shape_cast %45 : vector<1x1x8x8xf32> to vector<8x8xf32>
    %47 = vector.shape_cast %44 : vector<8x8xf32> to vector<1x1x8x8xf32>
    tpu.vector_store %arg14[%c0_33, %c0_34, %c0_35, %c0_36], %47 {strides = array<i32>} : memref<1x4x8x8xf32, #tpu.memory_space<vmem>>, vector<1x1x8x8xf32>,
    %cst_37 = arith.constant dense<0.000000e+00> : vector<8x8xf32>
    %48 = tpu.matmul %44, %31, %cst_37 {dimension_numbers = #tpu.dot_dimension_numbers<[1], [0], [0], [1], [0, 0, 1, 1], [], []>} : vector<8x8xf32>, vector<8x8xf32>, vector<8x8xf32> -> vector<8x8xf32>
    %49 = vector.extract_strided_slice %27 {offsets = [0, 0], sizes = [8, 32], strides = [1, 1]} : vector<32x32xf32> to vector<8x32xf32>
    %cst_38 = arith.constant dense<0.000000e+00> : vector<8x32xf32>
    %50 = tpu.matmul %48, %49, %cst_38 {dimension_numbers = #tpu.dot_dimension_numbers<[1], [0], [0], [1], [0, 0, 1, 1], [], []>} : vector<8x8xf32>, vector<8x32xf32>, vector<8x32xf32> -> vector<8x32xf32>
    %51 = arith.addf %28, %50 : vector<8x32xf32>
    %52 = vector.extract_strided_slice %14 {offsets = [0, 8], sizes = [8, 8], strides = [1, 1]} : vector<8x32xf32> to vector<8x8xf32>
    %53 = vector.extract_strided_slice %19 {offsets = [0, 8], sizes = [8, 8], strides = [1, 1]} : vector<8x32xf32> to vector<8x8xf32>
    %54 = vector.extract_strided_slice %24 {offsets = [0, 8], sizes = [8, 8], strides = [1, 1]} : vector<8x32xf32> to vector<8x8xf32>
    %cst_39 = arith.constant dense<0.000000e+00> : vector<8x8xf32>
    %55 = tpu.matmul %52, %53, %cst_39 {dimension_numbers = #tpu.dot_dimension_numbers<[1], [1], [0], [0], [0, 0, 1, 0], [], []>} : vector<8x8xf32>, vector<8x8xf32>, vector<8x8xf32> -> vector<8x8xf32>
    %cst_40 = arith.constant -1.000000e+09 : f32
    %56 = vector.broadcast %cst_40 : f32 to vector<8x8xf32>
    %57 = arith.select %26, %56, %55 : vector<8x8xi1>, vector<8x8xf32>
    %cst_41 = arith.constant dense<0xFF800000> : vector<8xf32>
    %58 = vector.multi_reduction <maximumf>, %57, %cst_41 [1] : vector<8x8xf32> to vector<8xf32>
    %59 = vector.shape_cast %58 : vector<8xf32> to vector<8x1xf32>
    %60 = vector.broadcast %59 : vector<8x1xf32> to vector<8x8xf32>
    %61 = arith.subf %57, %60 : vector<8x8xf32>
    %62 = math.exp %61 : vector<8x8xf32>
    %cst_42 = arith.constant dense<0.000000e+00> : vector<8xf32>
    %63 = vector.multi_reduction <add>, %62, %cst_42 [1] : vector<8x8xf32> to vector<8xf32>
    %64 = vector.shape_cast %63 : vector<8xf32> to vector<8x1xf32>
    %65 = tpu.reciprocal %64 {approx = true} : vector<8x1xf32> -> vector<8x1xf32>
    %66 = vector.broadcast %65 : vector<8x1xf32> to vector<8x8xf32>
    %67 = arith.mulf %62, %66 : vector<8x8xf32>
    %c0_43 = arith.constant 0 : index
    %c1 = arith.constant 1 : index
    %c0_44 = arith.constant 0 : index
    %c0_45 = arith.constant 0 : index
    %68 = vector.load %arg14[%c0_43, %c1, %c0_44, %c0_45] : memref<1x4x8x8xf32, #tpu.memory_space<vmem>>, vector<1x1x8x8xf32>
    %69 = vector.shape_cast %68 : vector<1x1x8x8xf32> to vector<8x8xf32>
    %70 = vector.shape_cast %67 : vector<8x8xf32> to vector<1x1x8x8xf32>
    tpu.vector_store %arg14[%c0_43, %c1, %c0_44, %c0_45], %70 {strides = array<i32>} : memref<1x4x8x8xf32, #tpu.memory_space<vmem>>, vector<1x1x8x8xf32>,
    %cst_46 = arith.constant dense<0.000000e+00> : vector<8x8xf32>
    %71 = tpu.matmul %67, %54, %cst_46 {dimension_numbers = #tpu.dot_dimension_numbers<[1], [0], [0], [1], [0, 0, 1, 1], [], []>} : vector<8x8xf32>, vector<8x8xf32>, vector<8x8xf32> -> vector<8x8xf32>
    %72 = vector.extract_strided_slice %27 {offsets = [8, 0], sizes = [8, 32], strides = [1, 1]} : vector<32x32xf32> to vector<8x32xf32>
    %cst_47 = arith.constant dense<0.000000e+00> : vector<8x32xf32>
    %73 = tpu.matmul %71, %72, %cst_47 {dimension_numbers = #tpu.dot_dimension_numbers<[1], [0], [0], [1], [0, 0, 1, 1], [], []>} : vector<8x8xf32>, vector<8x32xf32>, vector<8x32xf32> -> vector<8x32xf32>
    %74 = arith.addf %51, %73 : vector<8x32xf32>
    %75 = vector.extract_strided_slice %14 {offsets = [0, 16], sizes = [8, 8], strides = [1, 1]} : vector<8x32xf32> to vector<8x8xf32>
    %76 = vector.extract_strided_slice %19 {offsets = [0, 16], sizes = [8, 8], strides = [1, 1]} : vector<8x32xf32> to vector<8x8xf32>
    %77 = vector.extract_strided_slice %24 {offsets = [0, 16], sizes = [8, 8], strides = [1, 1]} : vector<8x32xf32> to vector<8x8xf32>
    %cst_48 = arith.constant dense<0.000000e+00> : vector<8x8xf32>
    %78 = tpu.matmul %75, %76, %cst_48 {dimension_numbers = #tpu.dot_dimension_numbers<[1], [1], [0], [0], [0, 0, 1, 0], [], []>} : vector<8x8xf32>, vector<8x8xf32>, vector<8x8xf32> -> vector<8x8xf32>
    %cst_49 = arith.constant -1.000000e+09 : f32
    %79 = vector.broadcast %cst_49 : f32 to vector<8x8xf32>
    %80 = arith.select %26, %79, %78 : vector<8x8xi1>, vector<8x8xf32>
    %cst_50 = arith.constant dense<0xFF800000> : vector<8xf32>
    %81 = vector.multi_reduction <maximumf>, %80, %cst_50 [1] : vector<8x8xf32> to vector<8xf32>
    %82 = vector.shape_cast %81 : vector<8xf32> to vector<8x1xf32>
    %83 = vector.broadcast %82 : vector<8x1xf32> to vector<8x8xf32>
    %84 = arith.subf %80, %83 : vector<8x8xf32>
    %85 = math.exp %84 : vector<8x8xf32>
    %cst_51 = arith.constant dense<0.000000e+00> : vector<8xf32>
    %86 = vector.multi_reduction <add>, %85, %cst_51 [1] : vector<8x8xf32> to vector<8xf32>
    %87 = vector.shape_cast %86 : vector<8xf32> to vector<8x1xf32>
    %88 = tpu.reciprocal %87 {approx = true} : vector<8x1xf32> -> vector<8x1xf32>
    %89 = vector.broadcast %88 : vector<8x1xf32> to vector<8x8xf32>
    %90 = arith.mulf %85, %89 : vector<8x8xf32>
    %c0_52 = arith.constant 0 : index
    %c2 = arith.constant 2 : index
    %c0_53 = arith.constant 0 : index
    %c0_54 = arith.constant 0 : index
    %91 = vector.load %arg14[%c0_52, %c2, %c0_53, %c0_54] : memref<1x4x8x8xf32, #tpu.memory_space<vmem>>, vector<1x1x8x8xf32>
    %92 = vector.shape_cast %91 : vector<1x1x8x8xf32> to vector<8x8xf32>
    %93 = vector.shape_cast %90 : vector<8x8xf32> to vector<1x1x8x8xf32>
    tpu.vector_store %arg14[%c0_52, %c2, %c0_53, %c0_54], %93 {strides = array<i32>} : memref<1x4x8x8xf32, #tpu.memory_space<vmem>>, vector<1x1x8x8xf32>,
    %cst_55 = arith.constant dense<0.000000e+00> : vector<8x8xf32>
    %94 = tpu.matmul %90, %77, %cst_55 {dimension_numbers = #tpu.dot_dimension_numbers<[1], [0], [0], [1], [0, 0, 1, 1], [], []>} : vector<8x8xf32>, vector<8x8xf32>, vector<8x8xf32> -> vector<8x8xf32>
    %95 = vector.extract_strided_slice %27 {offsets = [16, 0], sizes = [8, 32], strides = [1, 1]} : vector<32x32xf32> to vector<8x32xf32>
    %cst_56 = arith.constant dense<0.000000e+00> : vector<8x32xf32>
    %96 = tpu.matmul %94, %95, %cst_56 {dimension_numbers = #tpu.dot_dimension_numbers<[1], [0], [0], [1], [0, 0, 1, 1], [], []>} : vector<8x8xf32>, vector<8x32xf32>, vector<8x32xf32> -> vector<8x32xf32>
    %97 = arith.addf %74, %96 : vector<8x32xf32>
    %98 = vector.extract_strided_slice %14 {offsets = [0, 24], sizes = [8, 8], strides = [1, 1]} : vector<8x32xf32> to vector<8x8xf32>
    %99 = vector.extract_strided_slice %19 {offsets = [0, 24], sizes = [8, 8], strides = [1, 1]} : vector<8x32xf32> to vector<8x8xf32>
    %100 = vector.extract_strided_slice %24 {offsets = [0, 24], sizes = [8, 8], strides = [1, 1]} : vector<8x32xf32> to vector<8x8xf32>
    %cst_57 = arith.constant dense<0.000000e+00> : vector<8x8xf32>
    %101 = tpu.matmul %98, %99, %cst_57 {dimension_numbers = #tpu.dot_dimension_numbers<[1], [1], [0], [0], [0, 0, 1, 0], [], []>} : vector<8x8xf32>, vector<8x8xf32>, vector<8x8xf32> -> vector<8x8xf32>
    %cst_58 = arith.constant -1.000000e+09 : f32
    %102 = vector.broadcast %cst_58 : f32 to vector<8x8xf32>
    %103 = arith.select %26, %102, %101 : vector<8x8xi1>, vector<8x8xf32>
    %cst_59 = arith.constant dense<0xFF800000> : vector<8xf32>
    %104 = vector.multi_reduction <maximumf>, %103, %cst_59 [1] : vector<8x8xf32> to vector<8xf32>
    %105 = vector.shape_cast %104 : vector<8xf32> to vector<8x1xf32>
    %106 = vector.broadcast %105 : vector<8x1xf32> to vector<8x8xf32>
    %107 = arith.subf %103, %106 : vector<8x8xf32>
    %108 = math.exp %107 : vector<8x8xf32>
    %cst_60 = arith.constant dense<0.000000e+00> : vector<8xf32>
    %109 = vector.multi_reduction <add>, %108, %cst_60 [1] : vector<8x8xf32> to vector<8xf32>
    %110 = vector.shape_cast %109 : vector<8xf32> to vector<8x1xf32>
    %111 = tpu.reciprocal %110 {approx = true} : vector<8x1xf32> -> vector<8x1xf32>
    %112 = vector.broadcast %111 : vector<8x1xf32> to vector<8x8xf32>
    %113 = arith.mulf %108, %112 : vector<8x8xf32>
    %c0_61 = arith.constant 0 : index
    %c3 = arith.constant 3 : index
    %c0_62 = arith.constant 0 : index
    %c0_63 = arith.constant 0 : index
    %114 = vector.load %arg14[%c0_61, %c3, %c0_62, %c0_63] : memref<1x4x8x8xf32, #tpu.memory_space<vmem>>, vector<1x1x8x8xf32>
    %115 = vector.shape_cast %114 : vector<1x1x8x8xf32> to vector<8x8xf32>
    %116 = vector.shape_cast %113 : vector<8x8xf32> to vector<1x1x8x8xf32>
    tpu.vector_store %arg14[%c0_61, %c3, %c0_62, %c0_63], %116 {strides = array<i32>} : memref<1x4x8x8xf32, #tpu.memory_space<vmem>>, vector<1x1x8x8xf32>,
    %cst_64 = arith.constant dense<0.000000e+00> : vector<8x8xf32>
    %117 = tpu.matmul %113, %100, %cst_64 {dimension_numbers = #tpu.dot_dimension_numbers<[1], [0], [0], [1], [0, 0, 1, 1], [], []>} : vector<8x8xf32>, vector<8x8xf32>, vector<8x8xf32> -> vector<8x8xf32>
    %118 = vector.extract_strided_slice %27 {offsets = [24, 0], sizes = [8, 32], strides = [1, 1]} : vector<32x32xf32> to vector<8x32xf32>
    %cst_65 = arith.constant dense<0.000000e+00> : vector<8x32xf32>
    %119 = tpu.matmul %117, %118, %cst_65 {dimension_numbers = #tpu.dot_dimension_numbers<[1], [0], [0], [1], [0, 0, 1, 1], [], []>} : vector<8x8xf32>, vector<8x32xf32>, vector<8x32xf32> -> vector<8x32xf32>
    %120 = arith.addf %97, %119 : vector<8x32xf32>
    %c0_66 = arith.constant 0 : index
    %c0_67 = arith.constant 0 : index
    %121 = vector.load %arg12[%c0_66, %c0_67] : memref<1x32xf32, #tpu.memory_space<vmem>>, vector<1x32xf32>
    %122 = vector.broadcast %121 : vector<1x32xf32> to vector<8x32xf32>
    %123 = arith.addf %120, %122 : vector<8x32xf32>
    %c0_68 = arith.constant 0 : index
    %c0_69 = arith.constant 0 : index
    %c0_70 = arith.constant 0 : index
    %124 = vector.load %arg13[%c0_68, %c0_69, %c0_70] : memref<1x8x32xf32, #tpu.memory_space<vmem>>, vector<1x8x32xf32>
    %125 = vector.shape_cast %124 : vector<1x8x32xf32> to vector<8x32xf32>
    %126 = vector.shape_cast %123 : vector<8x32xf32> to vector<1x8x32xf32>
    tpu.vector_store %arg13[%c0_68, %c0_69, %c0_70], %126 {strides = array<i32>} : memref<1x8x32xf32, #tpu.memory_space<vmem>>, vector<1x8x32xf32>,
    return
  }
  func.func @transform_0(%arg0: i32) -> (i32, i32, i32) {
    %c0_i32 = arith.constant 0 : i32
    %c0_i32_0 = arith.constant 0 : i32
    %c0_i32_1 = arith.constant 0 : i32
    return %arg0, %c0_i32, %c0_i32_0 : i32, i32, i32
  }
  func.func @transform_1(%arg0: i32) -> (i32, i32, i32) {
    %c0_i32 = arith.constant 0 : i32
    %c0_i32_0 = arith.constant 0 : i32
    %c0_i32_1 = arith.constant 0 : i32
    return %arg0, %c0_i32, %c0_i32_0 : i32, i32, i32
  }
  func.func @transform_2(%arg0: i32) -> (i32, i32, i32) {
    %c0_i32 = arith.constant 0 : i32
    %c0_i32_0 = arith.constant 0 : i32
    %c0_i32_1 = arith.constant 0 : i32
    return %arg0, %c0_i32, %c0_i32_0 : i32, i32, i32
  }
  func.func @transform_3(%arg0: i32) -> (i32, i32, i32) {
    %c0_i32 = arith.constant 0 : i32
    %c0_i32_0 = arith.constant 0 : i32
    %c0_i32_1 = arith.constant 0 : i32
    return %arg0, %c0_i32, %c0_i32_0 : i32, i32, i32
  }
  func.func @transform_4(%arg0: i32) -> (i32, i32) {
    %c0_i32 = arith.constant 0 : i32
    %c0_i32_0 = arith.constant 0 : i32
    %c0_i32_1 = arith.constant 0 : i32
    return %c0_i32, %c0_i32_0 : i32, i32
  }
  func.func @transform_5(%arg0: i32) -> (i32, i32) {
    %c0_i32 = arith.constant 0 : i32
    %c0_i32_0 = arith.constant 0 : i32
    %c0_i32_1 = arith.constant 0 : i32
    return %c0_i32, %c0_i32_0 : i32, i32
  }
  func.func @transform_6(%arg0: i32) -> (i32, i32) {
    %c0_i32 = arith.constant 0 : i32
    %c0_i32_0 = arith.constant 0 : i32
    %c0_i32_1 = arith.constant 0 : i32
    return %c0_i32, %c0_i32_0 : i32, i32
  }
  func.func @transform_7(%arg0: i32) -> (i32, i32) {
    %c0_i32 = arith.constant 0 : i32
    %c0_i32_0 = arith.constant 0 : i32
    %c0_i32_1 = arith.constant 0 : i32
    return %c0_i32, %c0_i32_0 : i32, i32
  }
  func.func @transform_8(%arg0: i32) -> (i32, i32) {
    %c0_i32 = arith.constant 0 : i32
    %c0_i32_0 = arith.constant 0 : i32
    %c0_i32_1 = arith.constant 0 : i32
    return %c0_i32, %c0_i32_0 : i32, i32
  }
  func.func @transform_9(%arg0: i32) -> (i32, i32) {
    %c0_i32 = arith.constant 0 : i32
    %c0_i32_0 = arith.constant 0 : i32
    %c0_i32_1 = arith.constant 0 : i32
    return %c0_i32, %c0_i32_0 : i32, i32
  }
  func.func @transform_10(%arg0: i32) -> (i32, i32) {
    %c0_i32 = arith.constant 0 : i32
    %c0_i32_0 = arith.constant 0 : i32
    %c0_i32_1 = arith.constant 0 : i32
    return %c0_i32, %c0_i32_0 : i32, i32
  }
  func.func @transform_11(%arg0: i32) -> (i32, i32) {
    %c0_i32 = arith.constant 0 : i32
    %c0_i32_0 = arith.constant 0 : i32
    %c0_i32_1 = arith.constant 0 : i32
    return %c0_i32, %c0_i32_0 : i32, i32
  }
  func.func @transform_12(%arg0: i32) -> (i32, i32, i32) {
    %c0_i32 = arith.constant 0 : i32
    %c0_i32_0 = arith.constant 0 : i32
    %c0_i32_1 = arith.constant 0 : i32
    return %arg0, %c0_i32, %c0_i32_0 : i32, i32, i32
  }
  func.func @transform_13(%arg0: i32) -> (i32, i32, i32, i32) {
    %c0_i32 = arith.constant 0 : i32
    %c0_i32_0 = arith.constant 0 : i32
    %c0_i32_1 = arith.constant 0 : i32
    %c0_i32_2 = arith.constant 0 : i32
    return %arg0, %c0_i32, %c0_i32_0, %c0_i32_1 : i32, i32, i32, i32
  }
}

</mosaic_0001>

<llo_original>
// kernel: tpu_custom_call.1
$region0: #{tpu_custom_call.1}
  #allocation0 [shape = 'u32[]', space=smem, size = 0x4, offset = 0x4, fixed_abs, tag = 'smem constant byte address 0x4 - core index']
  #allocation1 [shape = 'u32[144,128]{1,0:T(1,128)}', space=vmem, size = 0x12000, scoped, tag = 'internal scratch']
  %s0 = inlined_call_operand.hbm [shape: f32[2,8,32], index: 0, kind: input, shape index: {}]
  %s1 = inlined_call_operand.hbm [shape: f32[2,8,32], index: 1, kind: input, shape index: {}]
  %s2 = inlined_call_operand.hbm [shape: f32[2,8,32], index: 2, kind: input, shape index: {}]
  %s3 = inlined_call_operand.hbm [shape: s32[2,8,8], index: 3, kind: input, shape index: {}]
  %s4 = inlined_call_operand.hbm [shape: f32[32,32], index: 4, kind: input, shape index: {}]
  %s5 = inlined_call_operand.vmem [shape: f32[1,32], index: 5, kind: input, shape index: {}]
  %s6 = inlined_call_operand.hbm [shape: f32[32,32], index: 6, kind: input, shape index: {}]
  %s7 = inlined_call_operand.vmem [shape: f32[1,32], index: 7, kind: input, shape index: {}]
  %s8 = inlined_call_operand.hbm [shape: f32[32,32], index: 8, kind: input, shape index: {}]
  %s9 = inlined_call_operand.vmem [shape: f32[1,32], index: 9, kind: input, shape index: {}]
  %s10 = inlined_call_operand.vmem [shape: f32[32,32], index: 10, kind: input, shape index: {}]
  %s11 = inlined_call_operand.vmem [shape: f32[1,32], index: 11, kind: input, shape index: {}]
  %s12 = inlined_call_operand.hbm [shape: f32[2,8,32], index: 12, kind: output, shape index: {0}]
  %s13 = inlined_call_operand.hbm [shape: f32[2,4,8,8], index: 13, kind: output, shape index: {1}]
  %14 = xla_tuple %s12, %s13
  %s15 = sld [smem:[#allocation0]]
  $region117: #{tpu_custom_call.1} parent=0
    _
  %s17 = ssub.s32 1, %s15
  %s18 = scalar_select 0, %s17, %s15
  $region1: #{tpu_custom_call.1} parent=0
    #allocation2 [shape = 'u8[8192]{0}', space=vmem, size = 0x2000, scoped, tag = 'input window, operand 0']
    #allocation3 [shape = 's32[2]{0}', space=sflag, size = 0x8, scoped, tag = 'scoped memory for tpu_custom_call.1']
    #allocation4 [shape = 's32[2]{0}', space=sflag, size = 0x8, scoped, tag = 'scoped memory for tpu_custom_call.1']
    #allocation5 [shape = 'u8[8192]{0}', space=vmem, size = 0x2000, scoped, tag = 'input window, operand 1']
    #allocation6 [shape = 's32[2]{0}', space=sflag, size = 0x8, scoped, tag = 'scoped memory for tpu_custom_call.1']
    #allocation7 [shape = 'u8[8192]{0}', space=vmem, size = 0x2000, scoped, tag = 'input window, operand 2']
    #allocation8 [shape = 'u8[8192]{0}', space=vmem, size = 0x2000, scoped, tag = 'input window, operand 3']
    #allocation9 [shape = 's32[2]{0}', space=sflag, size = 0x8, scoped, tag = 'scoped memory for tpu_custom_call.1']
    #allocation10 [shape = 'u8[16384]{0}', space=vmem, size = 0x4000, scoped, tag = 'input window, operand 4, single buffered']
    #allocation11 [shape = 'u8[16384]{0}', space=vmem, size = 0x4000, scoped, tag = 'input window, operand 6, single buffered']
    #allocation12 [shape = 's32[1]{0}', space=sflag, size = 0x4, scoped, tag = 'scoped memory for tpu_custom_call.1']
    #allocation13 [shape = 'u8[16384]{0}', space=vmem, size = 0x4000, scoped, tag = 'input window, operand 8, single buffered']
    #allocation14 [shape = 'u8[8192]{0}', space=vmem, size = 0x2000, scoped, tag = 'output window, operand 0']
    #allocation15 [shape = 'u8[32768]{0}', space=vmem, size = 0x8000, scoped, tag = 'output window, operand 1']
    #allocation16 [shape = 's32[2]{0}', space=sflag, size = 0x8, scoped, tag = 'scoped memory for tpu_custom_call.1']
    %19 = vsyncpa [#allocation3], 0
    %s20 = scalar_lea.sflag [#allocation3], 1
    %21 = vsyncpa %s20, 0
    %22 = vsyncpa [#allocation6], 0
    %s23 = scalar_lea.sflag [#allocation6], 1
    %24 = vsyncpa %s23, 0
    %25 = vsyncpa [#allocation9], 0
    %s26 = scalar_lea.sflag [#allocation9], 1
    %27 = vsyncpa %s26, 0
    %28 = vsyncpa [#allocation12], 0
    %29 = vsyncpa [#allocation4], 0
    %s30 = scalar_lea.sflag [#allocation4], 1
    %31 = vsyncpa %s30, 0
    %32 = vsyncpa [#allocation16], 0
    %s33 = scalar_lea.sflag [#allocation16], 1
    %34 = vsyncpa %s33, 0
    loop: start=0, step=1, limit=4
    $region2: #{tpu_custom_call.1} parent=1 // loop_pre_header
      _
    $region3: #{tpu_custom_call.1} parent=1 // loop_header
      %s36 = sphi 0, %s40
      %p37 = scmp.ge.s32.totalorder %s36, 4
      %s46 = sphi 0, %s48
      %s49 = sphi 0, %s46
      %s50 = sphi 0, %s49
      %s66 = sphi 0, %s50
      %s72 = sphi 0, %s74
      %s75 = sphi 0, %s72
      %s76 = sphi 0, %s75
      %s92 = sphi 0, %s76
      %s98 = sphi 0, %s100
      %s101 = sphi 0, %s98
      %s102 = sphi 0, %s101
      %s118 = sphi 0, %s102
      %s124 = sphi 0, %s126
      %s127 = sphi 0, %s124
      %s128 = sphi 0, %s127
      %s144 = sphi 0, %s128
      %s148 = sphi 0, %s148
      %s150 = sphi 0, %s148
      %s151 = sphi 0, %s150
      %s165 = sphi 0, %s151
      %s169 = sphi 0, %s169
      %s171 = sphi 0, %s169
      %s172 = sphi 0, %s171
      %s186 = sphi 0, %s172
      %s190 = sphi 0, %s190
      %s192 = sphi 0, %s190
      %s193 = sphi 0, %s192
      %s207 = sphi 0, %s193
      %s211 = sphi 0, %s211
      %s213 = sphi 0, %s211
      %s214 = sphi 0, %s213
      %s228 = sphi 0, %s214
      %s232 = sphi 0, %s232
      %s234 = sphi 0, %s232
      %s235 = sphi 0, %s234
      %s249 = sphi 0, %s235
      %s253 = sphi 0, %s253
      %s255 = sphi 0, %s253
      %s256 = sphi 0, %s255
      %s270 = sphi 0, %s256
      %s274 = sphi 0, %s274
      %s276 = sphi 0, %s274
      %s277 = sphi 0, %s276
      %s291 = sphi 0, %s277
      %s295 = sphi 0, %s295
      %s297 = sphi 0, %s295
      %s298 = sphi 0, %s297
      %s312 = sphi 0, %s298
      %s318 = sphi 0, %s320
      %s321 = sphi 0, %s318
      %s322 = sphi 0, %s321
      %s338 = sphi 0, %s322
      %s344 = sphi 0, %s346
      %s347 = sphi 0, %s344
      %s348 = sphi 0, %s347
      %s364 = sphi 0, %s348
    $region4: #{tpu_custom_call.1} parent=1 // loop_header_branch
      %39 = sbr.rel (%p37) target = $region8
    $region5: #{tpu_custom_call.1} parent=1 // loop_body
      %s41 = ssub.s32 %s36, 1
      %s42 = ssub.s32 %s36, 2
      %s43 = sadd.s32 %s36, 1
      %s44 = ssub.s32 %s36, %s43
      %p45 = scmp.eq.s32.totalorder %s44, 0
      %s47 = sadd.s32 %s46, 1
      %s48 = scalar_select %p45, %s46, %s47
      %p51 = pneg %p45
      %p52 = scmp.eq.s32.totalorder %s36, 1
      %p53 = por %p51, %p52
      %p54 = scmp.ne.s32.totalorder %s46, %s49
      %p55 = scmp.eq.s32.totalorder %s36, 0
      %p56 = por %p54, %p55
      %p57 = scmp.ne.s32.totalorder %s46, %s49
      %p58 = scmp.eq.s32.totalorder %s41, 1
      %p59 = por %p57, %p58
      %p60 = scmp.ne.s32.totalorder %s49, %s50
      %p61 = scmp.eq.s32.totalorder %s41, 0
      %p62 = por %p60, %p61
      %p63 = scmp.ne.s32.totalorder %s49, %s50
      %p64 = scmp.eq.s32.totalorder %s42, 1
      %p65 = por %p63, %p64
      %p67 = scmp.ne.s32.totalorder %s50, %s66
      %p68 = scmp.eq.s32.totalorder %s42, 0
      %p69 = por %p67, %p68
      %s70 = ssub.s32 %s36, %s43
      %p71 = scmp.eq.s32.totalorder %s70, 0
      %s73 = sadd.s32 %s72, 1
      %s74 = scalar_select %p71, %s72, %s73
      %p77 = pneg %p71
      %p78 = scmp.eq.s32.totalorder %s36, 1
      %p79 = por %p77, %p78
      %p80 = scmp.ne.s32.totalorder %s72, %s75
      %p81 = scmp.eq.s32.totalorder %s36, 0
      %p82 = por %p80, %p81
      %p83 = scmp.ne.s32.totalorder %s72, %s75
      %p84 = scmp.eq.s32.totalorder %s41, 1
      %p85 = por %p83, %p84
      %p86 = scmp.ne.s32.totalorder %s75, %s76
      %p87 = scmp.eq.s32.totalorder %s41, 0
      %p88 = por %p86, %p87
      %p89 = scmp.ne.s32.totalorder %s75, %s76
      %p90 = scmp.eq.s32.totalorder %s42, 1
      %p91 = por %p89, %p90
      %p93 = scmp.ne.s32.totalorder %s76, %s92
      %p94 = scmp.eq.s32.totalorder %s42, 0
      %p95 = por %p93, %p94
      %s96 = ssub.s32 %s36, %s43
      %p97 = scmp.eq.s32.totalorder %s96, 0
      %s99 = sadd.s32 %s98, 1
      %s100 = scalar_select %p97, %s98, %s99
      %p103 = pneg %p97
      %p104 = scmp.eq.s32.totalorder %s36, 1
      %p105 = por %p103, %p104
      %p106 = scmp.ne.s32.totalorder %s98, %s101
      %p107 = scmp.eq.s32.totalorder %s36, 0
      %p108 = por %p106, %p107
      %p109 = scmp.ne.s32.totalorder %s98, %s101
      %p110 = scmp.eq.s32.totalorder %s41, 1
      %p111 = por %p109, %p110
      %p112 = scmp.ne.s32.totalorder %s101, %s102
      %p113 = scmp.eq.s32.totalorder %s41, 0
      %p114 = por %p112, %p113
      %p115 = scmp.ne.s32.totalorder %s101, %s102
      %p116 = scmp.eq.s32.totalorder %s42, 1
      %p117 = por %p115, %p116
      %p119 = scmp.ne.s32.totalorder %s102, %s118
      %p120 = scmp.eq.s32.totalorder %s42, 0
      %p121 = por %p119, %p120
      %s122 = ssub.s32 %s36, %s43
      %p123 = scmp.eq.s32.totalorder %s122, 0
      %s125 = sadd.s32 %s124, 1
      %s126 = scalar_select %p123, %s124, %s125
      %p129 = pneg %p123
      %p130 = scmp.eq.s32.totalorder %s36, 1
      %p131 = por %p129, %p130
      %p132 = scmp.ne.s32.totalorder %s124, %s127
      %p133 = scmp.eq.s32.totalorder %s36, 0
      %p134 = por %p132, %p133
      %p135 = scmp.ne.s32.totalorder %s124, %s127
      %p136 = scmp.eq.s32.totalorder %s41, 1
      %p137 = por %p135, %p136
      %p138 = scmp.ne.s32.totalorder %s127, %s128
      %p139 = scmp.eq.s32.totalorder %s41, 0
      %p140 = por %p138, %p139
      %p141 = scmp.ne.s32.totalorder %s127, %s128
      %p142 = scmp.eq.s32.totalorder %s42, 1
      %p143 = por %p141, %p142
      %p145 = scmp.ne.s32.totalorder %s128, %s144
      %p146 = scmp.eq.s32.totalorder %s42, 0
      %p147 = por %p145, %p146
      %s149 = sadd.s32 %s148, 1
      %p152 = scmp.eq.s32.totalorder %s36, 1
      %p153 = scmp.ne.s32.totalorder %s148, %s150
      %p154 = scmp.eq.s32.totalorder %s36, 0
      %p155 = por %p153, %p154
      %p156 = scmp.ne.s32.totalorder %s148, %s150
      %p157 = scmp.eq.s32.totalorder %s41, 1
      %p158 = por %p156, %p157
      %p159 = scmp.ne.s32.totalorder %s150, %s151
      %p160 = scmp.eq.s32.totalorder %s41, 0
      %p161 = por %p159, %p160
      %p162 = scmp.ne.s32.totalorder %s150, %s151
      %p163 = scmp.eq.s32.totalorder %s42, 1
      %p164 = por %p162, %p163
      %p166 = scmp.ne.s32.totalorder %s151, %s165
      %p167 = scmp.eq.s32.totalorder %s42, 0
      %p168 = por %p166, %p167
      %s170 = sadd.s32 %s169, 1
      %p173 = scmp.eq.s32.totalorder %s36, 1
      %p174 = scmp.ne.s32.totalorder %s169, %s171
      %p175 = scmp.eq.s32.totalorder %s36, 0
      %p176 = por %p174, %p175
      %p177 = scmp.ne.s32.totalorder %s169, %s171
      %p178 = scmp.eq.s32.totalorder %s41, 1
      %p179 = por %p177, %p178
      %p180 = scmp.ne.s32.totalorder %s171, %s172
      %p181 = scmp.eq.s32.totalorder %s41, 0
      %p182 = por %p180, %p181
      %p183 = scmp.ne.s32.totalorder %s171, %s172
      %p184 = scmp.eq.s32.totalorder %s42, 1
      %p185 = por %p183, %p184
      %p187 = scmp.ne.s32.totalorder %s172, %s186
      %p188 = scmp.eq.s32.totalorder %s42, 0
      %p189 = por %p187, %p188
      %s191 = sadd.s32 %s190, 1
      %p194 = scmp.eq.s32.totalorder %s36, 1
      %p195 = scmp.ne.s32.totalorder %s190, %s192
      %p196 = scmp.eq.s32.totalorder %s36, 0
      %p197 = por %p195, %p196
      %p198 = scmp.ne.s32.totalorder %s190, %s192
      %p199 = scmp.eq.s32.totalorder %s41, 1
      %p200 = por %p198, %p199
      %p201 = scmp.ne.s32.totalorder %s192, %s193
      %p202 = scmp.eq.s32.totalorder %s41, 0
      %p203 = por %p201, %p202
      %p204 = scmp.ne.s32.totalorder %s192, %s193
      %p205 = scmp.eq.s32.totalorder %s42, 1
      %p206 = por %p204, %p205
      %p208 = scmp.ne.s32.totalorder %s193, %s207
      %p209 = scmp.eq.s32.totalorder %s42, 0
      %p210 = por %p208, %p209
      %s212 = sadd.s32 %s211, 1
      %p215 = scmp.eq.s32.totalorder %s36, 1
      %p216 = scmp.ne.s32.totalorder %s211, %s213
      %p217 = scmp.eq.s32.totalorder %s36, 0
      %p218 = por %p216, %p217
      %p219 = scmp.ne.s32.totalorder %s211, %s213
      %p220 = scmp.eq.s32.totalorder %s41, 1
      %p221 = por %p219, %p220
      %p222 = scmp.ne.s32.totalorder %s213, %s214
      %p223 = scmp.eq.s32.totalorder %s41, 0
      %p224 = por %p222, %p223
      %p225 = scmp.ne.s32.totalorder %s213, %s214
      %p226 = scmp.eq.s32.totalorder %s42, 1
      %p227 = por %p225, %p226
      %p229 = scmp.ne.s32.totalorder %s214, %s228
      %p230 = scmp.eq.s32.totalorder %s42, 0
      %p231 = por %p229, %p230
      %s233 = sadd.s32 %s232, 1
      %p236 = scmp.eq.s32.totalorder %s36, 1
      %p237 = scmp.ne.s32.totalorder %s232, %s234
      %p238 = scmp.eq.s32.totalorder %s36, 0
      %p239 = por %p237, %p238
      %p240 = scmp.ne.s32.totalorder %s232, %s234
      %p241 = scmp.eq.s32.totalorder %s41, 1
      %p242 = por %p240, %p241
      %p243 = scmp.ne.s32.totalorder %s234, %s235
      %p244 = scmp.eq.s32.totalorder %s41, 0
      %p245 = por %p243, %p244
      %p246 = scmp.ne.s32.totalorder %s234, %s235
      %p247 = scmp.eq.s32.totalorder %s42, 1
      %p248 = por %p246, %p247
      %p250 = scmp.ne.s32.totalorder %s235, %s249
      %p251 = scmp.eq.s32.totalorder %s42, 0
      %p252 = por %p250, %p251
      %s254 = sadd.s32 %s253, 1
      %p257 = scmp.eq.s32.totalorder %s36, 1
      %p258 = scmp.ne.s32.totalorder %s253, %s255
      %p259 = scmp.eq.s32.totalorder %s36, 0
      %p260 = por %p258, %p259
      %p261 = scmp.ne.s32.totalorder %s253, %s255
      %p262 = scmp.eq.s32.totalorder %s41, 1
      %p263 = por %p261, %p262
      %p264 = scmp.ne.s32.totalorder %s255, %s256
      %p265 = scmp.eq.s32.totalorder %s41, 0
      %p266 = por %p264, %p265
      %p267 = scmp.ne.s32.totalorder %s255, %s256
      %p268 = scmp.eq.s32.totalorder %s42, 1
      %p269 = por %p267, %p268
      %p271 = scmp.ne.s32.totalorder %s256, %s270
      %p272 = scmp.eq.s32.totalorder %s42, 0
      %p273 = por %p271, %p272
      %s275 = sadd.s32 %s274, 1
      %p278 = scmp.eq.s32.totalorder %s36, 1
      %p279 = scmp.ne.s32.totalorder %s274, %s276
      %p280 = scmp.eq.s32.totalorder %s36, 0
      %p281 = por %p279, %p280
      %p282 = scmp.ne.s32.totalorder %s274, %s276
      %p283 = scmp.eq.s32.totalorder %s41, 1
      %p284 = por %p282, %p283
      %p285 = scmp.ne.s32.totalorder %s276, %s277
      %p286 = scmp.eq.s32.totalorder %s41, 0
      %p287 = por %p285, %p286
      %p288 = scmp.ne.s32.totalorder %s276, %s277
      %p289 = scmp.eq.s32.totalorder %s42, 1
      %p290 = por %p288, %p289
      %p292 = scmp.ne.s32.totalorder %s277, %s291
      %p293 = scmp.eq.s32.totalorder %s42, 0
      %p294 = por %p292, %p293
      %s296 = sadd.s32 %s295, 1
      %p299 = scmp.eq.s32.totalorder %s36, 1
      %p300 = scmp.ne.s32.totalorder %s295, %s297
      %p301 = scmp.eq.s32.totalorder %s36, 0
      %p302 = por %p300, %p301
      %p303 = scmp.ne.s32.totalorder %s295, %s297
      %p304 = scmp.eq.s32.totalorder %s41, 1
      %p305 = por %p303, %p304
      %p306 = scmp.ne.s32.totalorder %s297, %s298
      %p307 = scmp.eq.s32.totalorder %s41, 0
      %p308 = por %p306, %p307
      %p309 = scmp.ne.s32.totalorder %s297, %s298
      %p310 = scmp.eq.s32.totalorder %s42, 1
      %p311 = por %p309, %p310
      %p313 = scmp.ne.s32.totalorder %s298, %s312
      %p314 = scmp.eq.s32.totalorder %s42, 0
      %p315 = por %p313, %p314
      %s316 = ssub.s32 %s36, %s43
      %p317 = scmp.eq.s32.totalorder %s316, 0
      %s319 = sadd.s32 %s318, 1
      %s320 = scalar_select %p317, %s318, %s319
      %p323 = pneg %p317
      %p324 = scmp.eq.s32.totalorder %s36, 1
      %p325 = por %p323, %p324
      %p326 = scmp.ne.s32.totalorder %s318, %s321
      %p327 = scmp.eq.s32.totalorder %s36, 0
      %p328 = por %p326, %p327
      %p329 = scmp.ne.s32.totalorder %s318, %s321
      %p330 = scmp.eq.s32.totalorder %s41, 1
      %p331 = por %p329, %p330
      %p332 = scmp.ne.s32.totalorder %s321, %s322
      %p333 = scmp.eq.s32.totalorder %s41, 0
      %p334 = por %p332, %p333
      %p335 = scmp.ne.s32.totalorder %s321, %s322
      %p336 = scmp.eq.s32.totalorder %s42, 1
      %p337 = por %p335, %p336
      %p339 = scmp.ne.s32.totalorder %s322, %s338
      %p340 = scmp.eq.s32.totalorder %s42, 0
      %p341 = por %p339, %p340
      %s342 = ssub.s32 %s36, %s43
      %p343 = scmp.eq.s32.totalorder %s342, 0
      %s345 = sadd.s32 %s344, 1
      %s346 = scalar_select %p343, %s344, %s345
      %p349 = pneg %p343
      %p350 = scmp.eq.s32.totalorder %s36, 1
      %p351 = por %p349, %p350
      %p352 = scmp.ne.s32.totalorder %s344, %s347
      %p353 = scmp.eq.s32.totalorder %s36, 0
      %p354 = por %p352, %p353
      %p355 = scmp.ne.s32.totalorder %s344, %s347
      %p356 = scmp.eq.s32.totalorder %s41, 1
      %p357 = por %p355, %p356
      %p358 = scmp.ne.s32.totalorder %s347, %s348
      %p359 = scmp.eq.s32.totalorder %s41, 0
      %p360 = por %p358, %p359
      %p361 = scmp.ne.s32.totalorder %s347, %s348
      %p362 = scmp.eq.s32.totalorder %s42, 1
      %p363 = por %p361, %p362
      %p365 = scmp.ne.s32.totalorder %s348, %s364
      %p366 = scmp.eq.s32.totalorder %s42, 0
      %p367 = por %p365, %p366
      %p368 = scmp.le.s32.totalorder 1, %s36
      %p369 = scmp.lt.s32.totalorder %s36, 3
      %p370 = pnand %p368, %p369
      %p371 = pneg %p370
      // Predicated region
      $region9: #{tpu_custom_call.1} parent=5 // pred_check
        _
      $region10: #{tpu_custom_call.1} parent=5 // pred_check_branch
        %373 = sbr.rel (%p370) target = $region12
      $region11: #{tpu_custom_call.1} parent=5 // pred_region
        %s374 = ssub.s32 %s36, 1
        // Predicated region
        $region13: #{tpu_custom_call.1} parent=11 // pred_check
          %p375 = pneg %p161
        $region14: #{tpu_custom_call.1} parent=11 // pred_check_branch
          %377 = sbr.rel (%p375) target = $region16
        $region15: #{tpu_custom_call.1} parent=11 // pred_region
          %s379 = ssub.s32 512, 512
          %380 = vsyncadd [#allocation9], %s379
          %s381 = sshll.u32 [#allocation10], 4
          %s382 = int_to_ptr.vmem [resolvable:$true] %s381
          %387 = dma.hbm_to_vmem [thread:$0]  %s4, 512, %s382, [#allocation9], 128, 128, 8
        $region16: #{tpu_custom_call.1} parent=11 // pred_fallthru
          _
        // Predicated region
        $region17: #{tpu_custom_call.1} parent=11 // pred_check
          %p388 = pneg %p182
        $region18: #{tpu_custom_call.1} parent=11 // pred_check_branch
          %390 = sbr.rel (%p388) target = $region20
        $region19: #{tpu_custom_call.1} parent=11 // pred_region
          _
        $region20: #{tpu_custom_call.1} parent=11 // pred_fallthru
          _
        // Predicated region
        $region21: #{tpu_custom_call.1} parent=11 // pred_check
          %p391 = pneg %p203
        $region22: #{tpu_custom_call.1} parent=11 // pred_check_branch
          %393 = sbr.rel (%p391) target = $region24
        $region23: #{tpu_custom_call.1} parent=11 // pred_region
          %s395 = ssub.s32 512, 512
          %396 = vsyncadd [#allocation12], %s395
          %s397 = sshll.u32 [#allocation11], 4
          %s398 = int_to_ptr.vmem [resolvable:$true] %s397
          %403 = dma.hbm_to_vmem [thread:$0]  %s6, 512, %s398, [#allocation12], 128, 128, 8
        $region24: #{tpu_custom_call.1} parent=11 // pred_fallthru
          _
        // Predicated region
        $region25: #{tpu_custom_call.1} parent=11 // pred_check
          %p404 = pneg %p224
        $region26: #{tpu_custom_call.1} parent=11 // pred_check_branch
          %406 = sbr.rel (%p404) target = $region28
        $region27: #{tpu_custom_call.1} parent=11 // pred_region
          _
        $region28: #{tpu_custom_call.1} parent=11 // pred_fallthru
          _
        // Predicated region
        $region29: #{tpu_custom_call.1} parent=11 // pred_check
          %p407 = pneg %p245
        $region30: #{tpu_custom_call.1} parent=11 // pred_check_branch
          %409 = sbr.rel (%p407) target = $region32
        $region31: #{tpu_custom_call.1} parent=11 // pred_region
          %s411 = ssub.s32 512, 512
          %412 = vsyncadd [#allocation12], %s411
          %s413 = sshll.u32 [#allocation13], 4
          %s414 = int_to_ptr.vmem [resolvable:$true] %s413
          %419 = dma.hbm_to_vmem [thread:$0]  %s8, 512, %s414, [#allocation12], 128, 128, 8
        $region32: #{tpu_custom_call.1} parent=11 // pred_fallthru
          _
        // Predicated region
        $region33: #{tpu_custom_call.1} parent=11 // pred_check
          %p420 = pneg %p266
        $region34: #{tpu_custom_call.1} parent=11 // pred_check_branch
          %422 = sbr.rel (%p420) target = $region36
        $region35: #{tpu_custom_call.1} parent=11 // pred_region
          _
        $region36: #{tpu_custom_call.1} parent=11 // pred_fallthru
          _
        // Predicated region
        $region37: #{tpu_custom_call.1} parent=11 // pred_check
          %p423 = pneg %p287
        $region38: #{tpu_custom_call.1} parent=11 // pred_check_branch
          %425 = sbr.rel (%p423) target = $region40
        $region39: #{tpu_custom_call.1} parent=11 // pred_region
          _
        $region40: #{tpu_custom_call.1} parent=11 // pred_fallthru
          _
        // Predicated region
        $region41: #{tpu_custom_call.1} parent=11 // pred_check
          %p426 = pneg %p308
        $region42: #{tpu_custom_call.1} parent=11 // pred_check_branch
          %428 = sbr.rel (%p426) target = $region44
        $region43: #{tpu_custom_call.1} parent=11 // pred_region
          _
        $region44: #{tpu_custom_call.1} parent=11 // pred_fallthru
          _
      $region12: #{tpu_custom_call.1} parent=5 // pred_fallthru
        _
      %p429 = scmp.lt.s32.totalorder %s36, 2
      // Predicated region
      $region45: #{tpu_custom_call.1} parent=5 // pred_check
        %p430 = pneg %p429
      $region46: #{tpu_custom_call.1} parent=5 // pred_check_branch
        %432 = sbr.rel (%p430) target = $region48
      $region47: #{tpu_custom_call.1} parent=5 // pred_region
        // Predicated region
        $region49: #{tpu_custom_call.1} parent=47 // pred_check
          %p433 = pneg %p56
        $region50: #{tpu_custom_call.1} parent=47 // pred_check_branch
          %435 = sbr.rel (%p433) target = $region52
        $region51: #{tpu_custom_call.1} parent=47 // pred_region
          %s436 = sand.u32 %s46, 1
          %s437 = scalar_lea.sflag [#allocation3], %s436
          %s438 = sand.u32 %s46, 1
          %s439 = smul.addr %s438, 8
          %s440 = scalar_lea.vmem [#allocation2], %s439
          %s442 = ssub.s32 128, 128
          %443 = vsyncadd %s437, %s442
          %s444 = smul.addr %s36, 128
          %s445 = scalar_lea.hbm %s0, %s444
          %s447 = sshll.u32 %s440, 4
          %s448 = int_to_ptr.vmem [resolvable:$true] %s447
          %450 = dma.hbm_to_vmem [thread:$0]  %s445, 128, %s448, %s437
        $region52: #{tpu_custom_call.1} parent=47 // pred_fallthru
          _
        // Predicated region
        $region53: #{tpu_custom_call.1} parent=47 // pred_check
          %p451 = pneg %p82
        $region54: #{tpu_custom_call.1} parent=47 // pred_check_branch
          %453 = sbr.rel (%p451) target = $region56
        $region55: #{tpu_custom_call.1} parent=47 // pred_region
          %s454 = sand.u32 %s36, 1
          %s455 = scalar_lea.sflag [#allocation6], %s454
          %s456 = sand.u32 %s72, 1
          %s457 = smul.addr %s456, 8
          %s458 = scalar_lea.vmem [#allocation5], %s457
          %s460 = ssub.s32 128, 128
          %461 = vsyncadd %s455, %s460
          %s462 = smul.addr %s36, 128
          %s463 = scalar_lea.hbm %s1, %s462
          %s465 = sshll.u32 %s458, 4
          %s466 = int_to_ptr.vmem [resolvable:$true] %s465
          %468 = dma.hbm_to_vmem [thread:$0]  %s463, 128, %s466, %s455
        $region56: #{tpu_custom_call.1} parent=47 // pred_fallthru
          _
        // Predicated region
        $region57: #{tpu_custom_call.1} parent=47 // pred_check
          %p469 = pneg %p108
        $region58: #{tpu_custom_call.1} parent=47 // pred_check_branch
          %471 = sbr.rel (%p469) target = $region60
        $region59: #{tpu_custom_call.1} parent=47 // pred_region
          %s472 = sand.u32 %s36, 1
          %s473 = scalar_lea.sflag [#allocation6], %s472
          %s474 = sand.u32 %s98, 1
          %s475 = smul.addr %s474, 8
          %s476 = scalar_lea.vmem [#allocation7], %s475
          %s478 = ssub.s32 128, 128
          %479 = vsyncadd %s473, %s478
          %s480 = smul.addr %s36, 128
          %s481 = scalar_lea.hbm %s2, %s480
          %s483 = sshll.u32 %s476, 4
          %s484 = int_to_ptr.vmem [resolvable:$true] %s483
          %486 = dma.hbm_to_vmem [thread:$0]  %s481, 128, %s484, %s473
        $region60: #{tpu_custom_call.1} parent=47 // pred_fallthru
          _
        // Predicated region
        $region61: #{tpu_custom_call.1} parent=47 // pred_check
          %p487 = pneg %p134
        $region62: #{tpu_custom_call.1} parent=47 // pred_check_branch
          %489 = sbr.rel (%p487) target = $region64
        $region63: #{tpu_custom_call.1} parent=47 // pred_region
          %s490 = sand.u32 %s36, 1
          %s491 = scalar_lea.sflag [#allocation9], %s490
          %s492 = sand.u32 %s124, 1
          %s493 = smul.addr %s492, 8
          %s494 = scalar_lea.vmem [#allocation8], %s493
          %s496 = ssub.s32 128, 128
          %497 = vsyncadd %s491, %s496
          %s498 = smul.addr %s36, 128
          %s499 = scalar_lea.hbm %s3, %s498
          %s501 = sshll.u32 %s494, 4
          %s502 = int_to_ptr.vmem [resolvable:$true] %s501
          %504 = dma.hbm_to_vmem [thread:$0]  %s499, 128, %s502, %s491
        $region64: #{tpu_custom_call.1} parent=47 // pred_fallthru
          _
      $region48: #{tpu_custom_call.1} parent=5 // pred_fallthru
        _
      %p505 = scmp.le.s32.totalorder 1, %s36
      %p506 = scmp.lt.s32.totalorder %s36, 3
      %p507 = pnand %p505, %p506
      %p508 = pneg %p507
      // Predicated region
      $region65: #{tpu_custom_call.1} parent=5 // pred_check
        _
      $region66: #{tpu_custom_call.1} parent=5 // pred_check_branch
        %510 = sbr.rel (%p507) target = $region68
      $region67: #{tpu_custom_call.1} parent=5 // pred_region
        %s511 = ssub.s32 %s36, 1
        %s512 = sand.u32 %s49, 1
        %s513 = scalar_lea.sflag [#allocation3], %s512
        %s514 = sand.u32 %s49, 1
        %s515 = smul.addr %s514, 8
        %s516 = scalar_lea.vmem [#allocation2], %s515
        // Predicated region
        $region69: #{tpu_custom_call.1} parent=67 // pred_check
          %p517 = pneg %p62
        $region70: #{tpu_custom_call.1} parent=67 // pred_check_branch
          %519 = sbr.rel (%p517) target = $region72
        $region71: #{tpu_custom_call.1} parent=67 // pred_region
          %520 = dma.done %s513, 128
        $region72: #{tpu_custom_call.1} parent=67 // pred_fallthru
          _
        %s521 = sand.u32 %s41, 1
        %s522 = scalar_lea.sflag [#allocation6], %s521
        %s523 = sand.u32 %s75, 1
        %s524 = smul.addr %s523, 8
        %s525 = scalar_lea.vmem [#allocation5], %s524
        // Predicated region
        $region73: #{tpu_custom_call.1} parent=67 // pred_check
          %p526 = pneg %p88
        $region74: #{tpu_custom_call.1} parent=67 // pred_check_branch
          %528 = sbr.rel (%p526) target = $region76
        $region75: #{tpu_custom_call.1} parent=67 // pred_region
          %529 = dma.done %s522, 128
        $region76: #{tpu_custom_call.1} parent=67 // pred_fallthru
          _
        %s530 = sand.u32 %s41, 1
        %s531 = scalar_lea.sflag [#allocation6], %s530
        %s532 = sand.u32 %s101, 1
        %s533 = smul.addr %s532, 8
        %s534 = scalar_lea.vmem [#allocation7], %s533
        // Predicated region
        $region77: #{tpu_custom_call.1} parent=67 // pred_check
          %p535 = pneg %p114
        $region78: #{tpu_custom_call.1} parent=67 // pred_check_branch
          %537 = sbr.rel (%p535) target = $region80
        $region79: #{tpu_custom_call.1} parent=67 // pred_region
          %538 = dma.done %s531, 128
        $region80: #{tpu_custom_call.1} parent=67 // pred_fallthru
          _
        %s539 = sand.u32 %s41, 1
        %s540 = scalar_lea.sflag [#allocation9], %s539
        %s541 = sand.u32 %s127, 1
        %s542 = smul.addr %s541, 8
        %s543 = scalar_lea.vmem [#allocation8], %s542
        // Predicated region
        $region81: #{tpu_custom_call.1} parent=67 // pred_check
          %p544 = pneg %p140
        $region82: #{tpu_custom_call.1} parent=67 // pred_check_branch
          %546 = sbr.rel (%p544) target = $region84
        $region83: #{tpu_custom_call.1} parent=67 // pred_region
          %547 = dma.done %s540, 128
        $region84: #{tpu_custom_call.1} parent=67 // pred_fallthru
          _
        // Predicated region
        $region85: #{tpu_custom_call.1} parent=67 // pred_check
          %p548 = pneg %p161
        $region86: #{tpu_custom_call.1} parent=67 // pred_check_branch
          %550 = sbr.rel (%p548) target = $region88
        $region87: #{tpu_custom_call.1} parent=67 // pred_region
          %551 = dma.done [#allocation9], 512
        $region88: #{tpu_custom_call.1} parent=67 // pred_fallthru
          _
        // Predicated region
        $region89: #{tpu_custom_call.1} parent=67 // pred_check
          %p552 = pneg %p203
        $region90: #{tpu_custom_call.1} parent=67 // pred_check_branch
          %554 = sbr.rel (%p552) target = $region92
        $region91: #{tpu_custom_call.1} parent=67 // pred_region
          %555 = dma.done [#allocation12], 512
        $region92: #{tpu_custom_call.1} parent=67 // pred_fallthru
          _
        // Predicated region
        $region93: #{tpu_custom_call.1} parent=67 // pred_check
          %p556 = pneg %p245
        $region94: #{tpu_custom_call.1} parent=67 // pred_check_branch
          %558 = sbr.rel (%p556) target = $region96
        $region95: #{tpu_custom_call.1} parent=67 // pred_region
          %559 = dma.done [#allocation12], 512
        $region96: #{tpu_custom_call.1} parent=67 // pred_fallthru
          _
        %s560 = sand.u32 %s49, 1
        %s561 = scalar_lea.sflag [#allocation3], %s560
        %s562 = sand.u32 %s49, 1
        %s563 = smul.addr %s562, 8
        %s564 = scalar_lea.vmem [#allocation2], %s563
        %p565 = pneg %p62
        %p566 = pneg %p59
        %s567 = sand.u32 %s41, 1
        %s568 = scalar_lea.sflag [#allocation6], %s567
        %s569 = sand.u32 %s75, 1
        %s570 = smul.addr %s569, 8
        %s571 = scalar_lea.vmem [#allocation5], %s570
        %p572 = pneg %p88
        %p573 = pneg %p85
        %s574 = sand.u32 %s41, 1
        %s575 = scalar_lea.sflag [#allocation6], %s574
        %s576 = sand.u32 %s101, 1
        %s577 = smul.addr %s576, 8
        %s578 = scalar_lea.vmem [#allocation7], %s577
        %p579 = pneg %p114
        %p580 = pneg %p111
        %s581 = sand.u32 %s41, 1
        %s582 = scalar_lea.sflag [#allocation9], %s581
        %s583 = sand.u32 %s127, 1
        %s584 = smul.addr %s583, 8
        %s585 = scalar_lea.vmem [#allocation8], %s584
        %p586 = pneg %p140
        %p587 = pneg %p137
        %p588 = pneg %p161
        %p589 = pneg %p158
        %p590 = pneg %p182
        %p591 = pneg %p179
        %p592 = pneg %p203
        %p593 = pneg %p200
        %p594 = pneg %p224
        %p595 = pneg %p221
        %p596 = pneg %p245
        %p597 = pneg %p242
        %p598 = pneg %p266
        %p599 = pneg %p263
        %p600 = pneg %p287
        %p601 = pneg %p284
        %p602 = pneg %p308
        %p603 = pneg %p305
        %p604 = pneg %p334
        %p605 = pneg %p331
        %s606 = sand.u32 %s321, 1
        %s607 = scalar_lea.sflag [#allocation4], %s606
        %s608 = sand.u32 %s321, 1
        %s609 = smul.addr %s608, 8
        %s610 = scalar_lea.vmem [#allocation14], %s609
        %p611 = pneg %p360
        %p612 = pneg %p357
        %s613 = sand.u32 %s347, 1
        %s614 = scalar_lea.sflag [#allocation16], %s613
        %s615 = sand.u32 %s347, 1
        %s616 = smul.addr %s615, 32
        %s617 = scalar_lea.vmem [#allocation15], %s616
        %v618 = vld [vmem:[%s516] sm:$0xff]
        %v619 = vld [vmem:[%s525] sm:$0xff]
        %v620 = vld [vmem:[%s534] sm:$0xff]
        %v621 = vld [vmem:[%s543] sm:$0xff]
        %v622 = vld [vmem:[#allocation10] sm:$0xff]
        %v623 = vld [vmem:[#allocation10 + $0x8] sm:$0xff]
        %v624 = vld [vmem:[#allocation10 + $0x10] sm:$0xff]
        %v625 = vld [vmem:[#allocation10 + $0x18] sm:$0xff]
        %v626 = vld [vmem:[%s5] sm:$0x1]
        %v628 = vlaneseq
        %v629 = vshrl.u32 %v628, 7
        %v630 = vsub.s32 0, %v629
        %v631 = vrot.slane %v626, %v630
        %vm633 = vcmask 261120
        %v635 = vsel %vm633, %v618, 0
        %637 = vmatprep.subr.mxu0 0.0
        %638 = vmatpush1.msra.mxu0 %v622
        %639 = vmatprep.subr.mxu0 0.0
        %640 = vmatpush1.msra.mxu0 %v623
        %641 = vmatprep.subr.mxu0 0.0
        %642 = vmatpush1.msra.mxu0 %v624
        %643 = vmatprep.subr.mxu0 0.0
        %644 = vmatpush1.msra.mxu0 %v625
        %645 = vmatprep.subr.mxu0 0.0
        %646 = vmatpush1.msra.mxu0 0.0
        %647 = vmatprep.subr.mxu0 0.0
        %648 = vmatpush1.msra.mxu0 0.0
        %649 = vmatprep.subr.mxu0 0.0
        %650 = vmatpush1.msra.mxu0 0.0
        %651 = vmatprep.subr.mxu0 0.0
        %652 = vmatpush1.msra.mxu0 0.0
        %653 = vmatprep.subr.mxu0 0.0
        %654 = vmatpush1.msra.mxu0 0.0
        %655 = vmatprep.subr.mxu0 0.0
        %656 = vmatpush1.msra.mxu0 0.0
        %657 = vmatprep.subr.mxu0 0.0
        %658 = vmatpush1.msra.mxu0 0.0
        %659 = vmatprep.subr.mxu0 0.0
        %660 = vmatpush1.msra.mxu0 0.0
        %661 = vmatprep.subr.mxu0 0.0
        %662 = vmatpush1.msra.mxu0 0.0
        %663 = vmatprep.subr.mxu0 0.0
        %664 = vmatpush1.msra.mxu0 0.0
        %665 = vmatprep.subr.mxu0 0.0
        %666 = vmatpush1.msra.mxu0 0.0
        %667 = vmatprep.subr.mxu0 0.0
        %668 = vmatpush1.msra.mxu0 0.0
        %669 = vmatprep.subr.mxu0 0.0
        %670 = vmatpush1.msra.mxu0 0.0
        %671 = vmatprep.subr.mxu0 0.0
        %672 = vmatpush1.msra.mxu0 0.0
        %673 = vmatprep.subr.mxu0 0.0
        %674 = vmatpush1.msra.mxu0 0.0
        %675 = vmatprep.subr.mxu0 0.0
        %676 = vmatpush1.msra.mxu0 0.0
        %677 = vmatprep.subr.mxu0 0.0
        %678 = vmatpush1.msra.mxu0 0.0
        %679 = vmatprep.subr.mxu0 0.0
        %680 = vmatpush1.msra.mxu0 0.0
        %681 = vmatprep.subr.mxu0 0.0
        %682 = vmatpush1.msra.mxu0 0.0
        %683 = vmatprep.subr.mxu0 0.0
        %684 = vmatpush1.msra.mxu0 0.0
        %685 = vmatprep.subr.mxu0 0.0
        %686 = vmatpush1.msra.mxu0 0.0
        %687 = vmatprep.subr.mxu0 0.0
        %688 = vmatpush1.msra.mxu0 0.0
        %689 = vmatprep.subr.mxu0 0.0
        %690 = vmatpush1.msra.mxu0 0.0
        %691 = vmatprep.subr.mxu0 0.0
        %692 = vmatpush1.msra.mxu0 0.0
        %693 = vmatprep.subr.mxu0 0.0
        %694 = vmatpush1.msra.mxu0 0.0
        %695 = vmatprep.subr.mxu0 0.0
        %696 = vmatpush1.msra.mxu0 0.0
        %697 = vmatprep.subr.mxu0 0.0
        %698 = vmatpush1.msra.mxu0 0.0
        %699 = vmatprep.subr.mxu0 0.0
        %700 = vmatpush1.msra.mxu0 0.0
        %701 = vmatprep.mubr.f32.mxu0 0.0
        %702 = vmatmul.mubr.f32.gmra.mrb[0].mxu0 %v635
        %v703 = vpop.f32.mrb[0].mxu0
        %v704 = vadd.f32 %v631, %v703
        %v705 = vpop.f32.mrb[0].mxu0
        %706 = vdwg.mxu0
        %v707 = vmul.f32 %v704, 0.35355338
        %v708 = vld [vmem:[#allocation11] sm:$0xff]
        %v709 = vld [vmem:[#allocation11 + $0x8] sm:$0xff]
        %v710 = vld [vmem:[#allocation11 + $0x10] sm:$0xff]
        %v711 = vld [vmem:[#allocation11 + $0x18] sm:$0xff]
        %v712 = vld [vmem:[%s7] sm:$0x1]
        %v714 = vlaneseq
        %v715 = vshrl.u32 %v714, 7
        %v716 = vsub.s32 0, %v715
        %v717 = vrot.slane %v712, %v716
        %v720 = vsel %vm633, %v619, 0
        %722 = vmatprep.subr.mxu0 0.0
        %723 = vmatpush1.msra.mxu0 %v708
        %724 = vmatprep.subr.mxu0 0.0
        %725 = vmatpush1.msra.mxu0 %v709
        %726 = vmatprep.subr.mxu0 0.0
        %727 = vmatpush1.msra.mxu0 %v710
        %728 = vmatprep.subr.mxu0 0.0
        %729 = vmatpush1.msra.mxu0 %v711
        %730 = vmatprep.subr.mxu0 0.0
        %731 = vmatpush1.msra.mxu0 0.0
        %732 = vmatprep.subr.mxu0 0.0
        %733 = vmatpush1.msra.mxu0 0.0
        %734 = vmatprep.subr.mxu0 0.0
        %735 = vmatpush1.msra.mxu0 0.0
        %736 = vmatprep.subr.mxu0 0.0
        %737 = vmatpush1.msra.mxu0 0.0
        %738 = vmatprep.subr.mxu0 0.0
        %739 = vmatpush1.msra.mxu0 0.0
        %740 = vmatprep.subr.mxu0 0.0
        %741 = vmatpush1.msra.mxu0 0.0
        %742 = vmatprep.subr.mxu0 0.0
        %743 = vmatpush1.msra.mxu0 0.0
        %744 = vmatprep.subr.mxu0 0.0
        %745 = vmatpush1.msra.mxu0 0.0
        %746 = vmatprep.subr.mxu0 0.0
        %747 = vmatpush1.msra.mxu0 0.0
        %748 = vmatprep.subr.mxu0 0.0
        %749 = vmatpush1.msra.mxu0 0.0
        %750 = vmatprep.subr.mxu0 0.0
        %751 = vmatpush1.msra.mxu0 0.0
        %752 = vmatprep.subr.mxu0 0.0
        %753 = vmatpush1.msra.mxu0 0.0
        %754 = vmatprep.subr.mxu0 0.0
        %755 = vmatpush1.msra.mxu0 0.0
        %756 = vmatprep.subr.mxu0 0.0
        %757 = vmatpush1.msra.mxu0 0.0
        %758 = vmatprep.subr.mxu0 0.0
        %759 = vmatpush1.msra.mxu0 0.0
        %760 = vmatprep.subr.mxu0 0.0
        %761 = vmatpush1.msra.mxu0 0.0
        %762 = vmatprep.subr.mxu0 0.0
        %763 = vmatpush1.msra.mxu0 0.0
        %764 = vmatprep.subr.mxu0 0.0
        %765 = vmatpush1.msra.mxu0 0.0
        %766 = vmatprep.subr.mxu0 0.0
        %767 = vmatpush1.msra.mxu0 0.0
        %768 = vmatprep.subr.mxu0 0.0
        %769 = vmatpush1.msra.mxu0 0.0
        %770 = vmatprep.subr.mxu0 0.0
        %771 = vmatpush1.msra.mxu0 0.0
        %772 = vmatprep.subr.mxu0 0.0
        %773 = vmatpush1.msra.mxu0 0.0
        %774 = vmatprep.subr.mxu0 0.0
        %775 = vmatpush1.msra.mxu0 0.0
        %776 = vmatprep.subr.mxu0 0.0
        %777 = vmatpush1.msra.mxu0 0.0
        %778 = vmatprep.subr.mxu0 0.0
        %779 = vmatpush1.msra.mxu0 0.0
        %780 = vmatprep.subr.mxu0 0.0
        %781 = vmatpush1.msra.mxu0 0.0
        %782 = vmatprep.subr.mxu0 0.0
        %783 = vmatpush1.msra.mxu0 0.0
        %784 = vmatprep.subr.mxu0 0.0
        %785 = vmatpush1.msra.mxu0 0.0
        %786 = vmatprep.mubr.f32.mxu0 0.0
        %787 = vmatmul.mubr.f32.gmra.mrb[0].mxu0 %v720
        %v788 = vpop.f32.mrb[0].mxu0
        %v789 = vadd.f32 %v717, %v788
        %v790 = vpop.f32.mrb[0].mxu0
        %791 = vdwg.mxu0
        %v792 = vld [vmem:[#allocation13] sm:$0xff]
        %v793 = vld [vmem:[#allocation13 + $0x8] sm:$0xff]
        %v794 = vld [vmem:[#allocation13 + $0x10] sm:$0xff]
        %v795 = vld [vmem:[#allocation13 + $0x18] sm:$0xff]
        %v796 = vld [vmem:[%s9] sm:$0x1]
        %v798 = vlaneseq
        %v799 = vshrl.u32 %v798, 7
        %v800 = vsub.s32 0, %v799
        %v801 = vrot.slane %v796, %v800
        %v804 = vsel %vm633, %v620, 0
        %806 = vmatprep.subr.mxu0 0.0
        %807 = vmatpush1.msra.mxu0 %v792
        %808 = vmatprep.subr.mxu0 0.0
        %809 = vmatpush1.msra.mxu0 %v793
        %810 = vmatprep.subr.mxu0 0.0
        %811 = vmatpush1.msra.mxu0 %v794
        %812 = vmatprep.subr.mxu0 0.0
        %813 = vmatpush1.msra.mxu0 %v795
        %814 = vmatprep.subr.mxu0 0.0
        %815 = vmatpush1.msra.mxu0 0.0
        %816 = vmatprep.subr.mxu0 0.0
        %817 = vmatpush1.msra.mxu0 0.0
        %818 = vmatprep.subr.mxu0 0.0
        %819 = vmatpush1.msra.mxu0 0.0
        %820 = vmatprep.subr.mxu0 0.0
        %821 = vmatpush1.msra.mxu0 0.0
        %822 = vmatprep.subr.mxu0 0.0
        %823 = vmatpush1.msra.mxu0 0.0
        %824 = vmatprep.subr.mxu0 0.0
        %825 = vmatpush1.msra.mxu0 0.0
        %826 = vmatprep.subr.mxu0 0.0
        %827 = vmatpush1.msra.mxu0 0.0
        %828 = vmatprep.subr.mxu0 0.0
        %829 = vmatpush1.msra.mxu0 0.0
        %830 = vmatprep.subr.mxu0 0.0
        %831 = vmatpush1.msra.mxu0 0.0
        %832 = vmatprep.subr.mxu0 0.0
        %833 = vmatpush1.msra.mxu0 0.0
        %834 = vmatprep.subr.mxu0 0.0
        %835 = vmatpush1.msra.mxu0 0.0
        %836 = vmatprep.subr.mxu0 0.0
        %837 = vmatpush1.msra.mxu0 0.0
        %838 = vmatprep.subr.mxu0 0.0
        %839 = vmatpush1.msra.mxu0 0.0
        %840 = vmatprep.subr.mxu0 0.0
        %841 = vmatpush1.msra.mxu0 0.0
        %842 = vmatprep.subr.mxu0 0.0
        %843 = vmatpush1.msra.mxu0 0.0
        %844 = vmatprep.subr.mxu0 0.0
        %845 = vmatpush1.msra.mxu0 0.0
        %846 = vmatprep.subr.mxu0 0.0
        %847 = vmatpush1.msra.mxu0 0.0
        %848 = vmatprep.subr.mxu0 0.0
        %849 = vmatpush1.msra.mxu0 0.0
        %850 = vmatprep.subr.mxu0 0.0
        %851 = vmatpush1.msra.mxu0 0.0
        %852 = vmatprep.subr.mxu0 0.0
        %853 = vmatpush1.msra.mxu0 0.0
        %854 = vmatprep.subr.mxu0 0.0
        %855 = vmatpush1.msra.mxu0 0.0
        %856 = vmatprep.subr.mxu0 0.0
        %857 = vmatpush1.msra.mxu0 0.0
        %858 = vmatprep.subr.mxu0 0.0
        %859 = vmatpush1.msra.mxu0 0.0
        %860 = vmatprep.subr.mxu0 0.0
        %861 = vmatpush1.msra.mxu0 0.0
        %862 = vmatprep.subr.mxu0 0.0
        %863 = vmatpush1.msra.mxu0 0.0
        %864 = vmatprep.subr.mxu0 0.0
        %865 = vmatpush1.msra.mxu0 0.0
        %866 = vmatprep.subr.mxu0 0.0
        %867 = vmatpush1.msra.mxu0 0.0
        %868 = vmatprep.subr.mxu0 0.0
        %869 = vmatpush1.msra.mxu0 0.0
        %870 = vmatprep.mubr.f32.mxu0 0.0
        %871 = vmatmul.mubr.f32.gmra.mrb[0].mxu0 %v804
        %v872 = vpop.f32.mrb[0].mxu0
        %v873 = vadd.f32 %v801, %v872
        %v874 = vpop.f32.mrb[0].mxu0
        %875 = vdwg.mxu0
        %vm876 = vcmp.ne.s32.totalorder %v621, 0
        %v877 = vld [vmem:[%s10] sm:$0xff]
        %v878 = vld [vmem:[%s10 + $0x8] sm:$0xff]
        %v879 = vld [vmem:[%s10 + $0x10] sm:$0xff]
        %v880 = vld [vmem:[%s10 + $0x18] sm:$0xff]
        %vm881 = vcmask 64512
        %v883 = vsel %vm881, %v707, 0
        %v886 = vsel %vm881, %v789, 0
        %888 = vmatprep.subr.mxu0 0.0
        %889 = vmatpush1.xpose.msra.mxu0 %v886
        %890 = vmatprep.subr.mxu0 0.0
        %891 = vmatpush1.xpose.msra.mxu0 0.0
        %892 = vmatprep.subr.mxu0 0.0
        %893 = vmatpush1.xpose.msra.mxu0 0.0
        %894 = vmatprep.subr.mxu0 0.0
        %895 = vmatpush1.xpose.msra.mxu0 0.0
        %896 = vmatprep.subr.mxu0 0.0
        %897 = vmatpush1.xpose.msra.mxu0 0.0
        %898 = vmatprep.subr.mxu0 0.0
        %899 = vmatpush1.xpose.msra.mxu0 0.0
        %900 = vmatprep.subr.mxu0 0.0
        %901 = vmatpush1.xpose.msra.mxu0 0.0
        %902 = vmatprep.subr.mxu0 0.0
        %903 = vmatpush1.xpose.msra.mxu0 0.0
        %904 = vmatprep.subr.mxu0 0.0
        %905 = vmatpush1.xpose.msra.mxu0 0.0
        %906 = vmatprep.subr.mxu0 0.0
        %907 = vmatpush1.xpose.msra.mxu0 0.0
        %908 = vmatprep.subr.mxu0 0.0
        %909 = vmatpush1.xpose.msra.mxu0 0.0
        %910 = vmatprep.subr.mxu0 0.0
        %911 = vmatpush1.xpose.msra.mxu0 0.0
        %912 = vmatprep.subr.mxu0 0.0
        %913 = vmatpush1.xpose.msra.mxu0 0.0
        %914 = vmatprep.subr.mxu0 0.0
        %915 = vmatpush1.xpose.msra.mxu0 0.0
        %916 = vmatprep.subr.mxu0 0.0
        %917 = vmatpush1.xpose.msra.mxu0 0.0
        %918 = vmatprep.subr.mxu0 0.0
        %919 = vmatpush1.xpose.msra.mxu0 0.0
        %920 = vmatprep.subr.mxu0 0.0
        %921 = vmatpush1.xpose.msra.mxu0 0.0
        %922 = vmatprep.subr.mxu0 0.0
        %923 = vmatpush1.xpose.msra.mxu0 0.0
        %924 = vmatprep.subr.mxu0 0.0
        %925 = vmatpush1.xpose.msra.mxu0 0.0
        %926 = vmatprep.subr.mxu0 0.0
        %927 = vmatpush1.xpose.msra.mxu0 0.0
        %928 = vmatprep.subr.mxu0 0.0
        %929 = vmatpush1.xpose.msra.mxu0 0.0
        %930 = vmatprep.subr.mxu0 0.0
        %931 = vmatpush1.xpose.msra.mxu0 0.0
        %932 = vmatprep.subr.mxu0 0.0
        %933 = vmatpush1.xpose.msra.mxu0 0.0
        %934 = vmatprep.subr.mxu0 0.0
        %935 = vmatpush1.xpose.msra.mxu0 0.0
        %936 = vmatprep.subr.mxu0 0.0
        %937 = vmatpush1.xpose.msra.mxu0 0.0
        %938 = vmatprep.subr.mxu0 0.0
        %939 = vmatpush1.xpose.msra.mxu0 0.0
        %940 = vmatprep.subr.mxu0 0.0
        %941 = vmatpush1.xpose.msra.mxu0 0.0
        %942 = vmatprep.subr.mxu0 0.0
        %943 = vmatpush1.xpose.msra.mxu0 0.0
        %944 = vmatprep.subr.mxu0 0.0
        %945 = vmatpush1.xpose.msra.mxu0 0.0
        %946 = vmatprep.subr.mxu0 0.0
        %947 = vmatpush1.xpose.msra.mxu0 0.0
        %948 = vmatprep.subr.mxu0 0.0
        %949 = vmatpush1.xpose.msra.mxu0 0.0
        %950 = vmatprep.subr.mxu0 0.0
        %951 = vmatpush1.xpose.msra.mxu0 0.0
        %952 = vmatprep.mubr.f32.mxu0 0.0
        %953 = vmatmul.mubr.f32.gmra.mrb[0].mxu0 %v883
        %v954 = vpop.f32.mrb[0].mxu0
        %v955 = vadd.f32 0.0, %v954
        %v956 = vpop.f32.mrb[0].mxu0
        %957 = vdwg.mxu0
        %v958 = vsel %vm876, -1e+09, %v955
        %v959 = vsel %vm881, %v958, -inf
        %960 = vmax.xlane.f32.xlu0 %v959
        %v961 = vpop.xlane.xlu0 %960
        %v962 = vsub.f32 %v958, %v961
        %v963 = vmul.f32 %v962, 1.442695
        %v964 = vpow.pop %v963
        %v965 = vsel %vm881, %v964, 0.0
        %966 = vadd.xlane.f32.xlu0 %v965
        %v967 = vpop.xlane.xlu0 %966
        %v968 = vrcp.pop %v967
        %v969 = vmul.f32 %v964, %v968
        %970 = vst.msk [vmem:[%s617] sm:$0xff] %vm881, %v969
        %v972 = vsel %vm881, %v969, 0
        %974 = vmatprep.subr.mxu0 0.0
        %975 = vmatpush1.msra.mxu0 %v873
        %976 = vmatprep.subr.mxu0 0.0
        %977 = vmatpush1.msra.mxu0 0.0
        %978 = vmatprep.subr.mxu0 0.0
        %979 = vmatpush1.msra.mxu0 0.0
        %980 = vmatprep.subr.mxu0 0.0
        %981 = vmatpush1.msra.mxu0 0.0
        %982 = vmatprep.subr.mxu0 0.0
        %983 = vmatpush1.msra.mxu0 0.0
        %984 = vmatprep.subr.mxu0 0.0
        %985 = vmatpush1.msra.mxu0 0.0
        %986 = vmatprep.subr.mxu0 0.0
        %987 = vmatpush1.msra.mxu0 0.0
        %988 = vmatprep.subr.mxu0 0.0
        %989 = vmatpush1.msra.mxu0 0.0
        %990 = vmatprep.subr.mxu0 0.0
        %991 = vmatpush1.msra.mxu0 0.0
        %992 = vmatprep.subr.mxu0 0.0
        %993 = vmatpush1.msra.mxu0 0.0
        %994 = vmatprep.subr.mxu0 0.0
        %995 = vmatpush1.msra.mxu0 0.0
        %996 = vmatprep.subr.mxu0 0.0
        %997 = vmatpush1.msra.mxu0 0.0
        %998 = vmatprep.subr.mxu0 0.0
        %999 = vmatpush1.msra.mxu0 0.0
        %1000 = vmatprep.subr.mxu0 0.0
        %1001 = vmatpush1.msra.mxu0 0.0
        %1002 = vmatprep.subr.mxu0 0.0
        %1003 = vmatpush1.msra.mxu0 0.0
        %1004 = vmatprep.subr.mxu0 0.0
        %1005 = vmatpush1.msra.mxu0 0.0
        %1006 = vmatprep.subr.mxu0 0.0
        %1007 = vmatpush1.msra.mxu0 0.0
        %1008 = vmatprep.subr.mxu0 0.0
        %1009 = vmatpush1.msra.mxu0 0.0
        %1010 = vmatprep.subr.mxu0 0.0
        %1011 = vmatpush1.msra.mxu0 0.0
        %1012 = vmatprep.subr.mxu0 0.0
        %1013 = vmatpush1.msra.mxu0 0.0
        %1014 = vmatprep.subr.mxu0 0.0
        %1015 = vmatpush1.msra.mxu0 0.0
        %1016 = vmatprep.subr.mxu0 0.0
        %1017 = vmatpush1.msra.mxu0 0.0
        %1018 = vmatprep.subr.mxu0 0.0
        %1019 = vmatpush1.msra.mxu0 0.0
        %1020 = vmatprep.subr.mxu0 0.0
        %1021 = vmatpush1.msra.mxu0 0.0
        %1022 = vmatprep.subr.mxu0 0.0
        %1023 = vmatpush1.msra.mxu0 0.0
        %1024 = vmatprep.subr.mxu0 0.0
        %1025 = vmatpush1.msra.mxu0 0.0
        %1026 = vmatprep.subr.mxu0 0.0
        %1027 = vmatpush1.msra.mxu0 0.0
        %1028 = vmatprep.subr.mxu0 0.0
        %1029 = vmatpush1.msra.mxu0 0.0
        %1030 = vmatprep.subr.mxu0 0.0
        %1031 = vmatpush1.msra.mxu0 0.0
        %1032 = vmatprep.subr.mxu0 0.0
        %1033 = vmatpush1.msra.mxu0 0.0
        %1034 = vmatprep.subr.mxu0 0.0
        %1035 = vmatpush1.msra.mxu0 0.0
        %1036 = vmatprep.subr.mxu0 0.0
        %1037 = vmatpush1.msra.mxu0 0.0
        %1038 = vmatprep.mubr.f32.mxu0 0.0
        %1039 = vmatmul.mubr.f32.gmra.mrb[0].mxu0 %v972
        %v1040 = vpop.f32.mrb[0].mxu0
        %v1041 = vadd.f32 0.0, %v1040
        %v1042 = vpop.f32.mrb[0].mxu0
        %1043 = vdwg.mxu0
        %1044 = vrot.lane.b32.xlu0 %v707, 120
        %v1045 = vpop.permute.xlu0 %1044
        %1046 = vrot.lane.b32.xlu0 %v789, 120
        %v1047 = vpop.permute.xlu0 %1046
        %v1048 = vsel %vm881, %v1045, 0
        %v1050 = vsel %vm881, %v1047, 0
        %1052 = vmatprep.subr.mxu0 0.0
        %1053 = vmatpush1.xpose.msra.mxu0 %v1050
        %1054 = vmatprep.subr.mxu0 0.0
        %1055 = vmatpush1.xpose.msra.mxu0 0.0
        %1056 = vmatprep.subr.mxu0 0.0
        %1057 = vmatpush1.xpose.msra.mxu0 0.0
        %1058 = vmatprep.subr.mxu0 0.0
        %1059 = vmatpush1.xpose.msra.mxu0 0.0
        %1060 = vmatprep.subr.mxu0 0.0
        %1061 = vmatpush1.xpose.msra.mxu0 0.0
        %1062 = vmatprep.subr.mxu0 0.0
        %1063 = vmatpush1.xpose.msra.mxu0 0.0
        %1064 = vmatprep.subr.mxu0 0.0
        %1065 = vmatpush1.xpose.msra.mxu0 0.0
        %1066 = vmatprep.subr.mxu0 0.0
        %1067 = vmatpush1.xpose.msra.mxu0 0.0
        %1068 = vmatprep.subr.mxu0 0.0
        %1069 = vmatpush1.xpose.msra.mxu0 0.0
        %1070 = vmatprep.subr.mxu0 0.0
        %1071 = vmatpush1.xpose.msra.mxu0 0.0
        %1072 = vmatprep.subr.mxu0 0.0
        %1073 = vmatpush1.xpose.msra.mxu0 0.0
        %1074 = vmatprep.subr.mxu0 0.0
        %1075 = vmatpush1.xpose.msra.mxu0 0.0
        %1076 = vmatprep.subr.mxu0 0.0
        %1077 = vmatpush1.xpose.msra.mxu0 0.0
        %1078 = vmatprep.subr.mxu0 0.0
        %1079 = vmatpush1.xpose.msra.mxu0 0.0
        %1080 = vmatprep.subr.mxu0 0.0
        %1081 = vmatpush1.xpose.msra.mxu0 0.0
        %1082 = vmatprep.subr.mxu0 0.0
        %1083 = vmatpush1.xpose.msra.mxu0 0.0
        %1084 = vmatprep.subr.mxu0 0.0
        %1085 = vmatpush1.xpose.msra.mxu0 0.0
        %1086 = vmatprep.subr.mxu0 0.0
        %1087 = vmatpush1.xpose.msra.mxu0 0.0
        %1088 = vmatprep.subr.mxu0 0.0
        %1089 = vmatpush1.xpose.msra.mxu0 0.0
        %1090 = vmatprep.subr.mxu0 0.0
        %1091 = vmatpush1.xpose.msra.mxu0 0.0
        %1092 = vmatprep.subr.mxu0 0.0
        %1093 = vmatpush1.xpose.msra.mxu0 0.0
        %1094 = vmatprep.subr.mxu0 0.0
        %1095 = vmatpush1.xpose.msra.mxu0 0.0
        %1096 = vmatprep.subr.mxu0 0.0
        %1097 = vmatpush1.xpose.msra.mxu0 0.0
        %1098 = vmatprep.subr.mxu0 0.0
        %1099 = vmatpush1.xpose.msra.mxu0 0.0
        %1100 = vmatprep.subr.mxu0 0.0
        %1101 = vmatpush1.xpose.msra.mxu0 0.0
        %1102 = vmatprep.subr.mxu0 0.0
        %1103 = vmatpush1.xpose.msra.mxu0 0.0
        %1104 = vmatprep.subr.mxu0 0.0
        %1105 = vmatpush1.xpose.msra.mxu0 0.0
        %1106 = vmatprep.subr.mxu0 0.0
        %1107 = vmatpush1.xpose.msra.mxu0 0.0
        %1108 = vmatprep.subr.mxu0 0.0
        %1109 = vmatpush1.xpose.msra.mxu0 0.0
        %1110 = vmatprep.subr.mxu0 0.0
        %1111 = vmatpush1.xpose.msra.mxu0 0.0
        %1112 = vmatprep.subr.mxu0 0.0
        %1113 = vmatpush1.xpose.msra.mxu0 0.0
        %1114 = vmatprep.subr.mxu0 0.0
        %1115 = vmatpush1.xpose.msra.mxu0 0.0
        %1116 = vmatprep.mubr.f32.mxu0 0.0
        %1117 = vmatmul.mubr.f32.gmra.mrb[0].mxu0 %v1048
        %v1118 = vpop.f32.mrb[0].mxu0
        %v1119 = vadd.f32 0.0, %v1118
        %v1120 = vpop.f32.mrb[0].mxu0
        %1121 = vdwg.mxu0
        %v1122 = vsel %vm876, -1e+09, %v1119
        %v1123 = vsel %vm881, %v1122, -inf
        %1124 = vmax.xlane.f32.xlu0 %v1123
        %v1125 = vpop.xlane.xlu0 %1124
        %v1126 = vsub.f32 %v1122, %v1125
        %v1127 = vmul.f32 %v1126, 1.442695
        %v1128 = vpow.pop %v1127
        %v1129 = vsel %vm881, %v1128, 0.0
        %1130 = vadd.xlane.f32.xlu0 %v1129
        %v1131 = vpop.xlane.xlu0 %1130
        %v1132 = vrcp.pop %v1131
        %v1133 = vmul.f32 %v1128, %v1132
        %s1134 = scalar_lea.vmem %s617, 8 [#allocation15]
        %1135 = vst.msk [vmem:[%s1134] sm:$0xff] %vm881, %v1133
        %1137 = vrot.lane.b32.xlu0 %v873, 120
        %v1138 = vpop.permute.xlu0 %1137
        %v1141 = vsel %vm881, %v1133, 0
        %1143 = vmatprep.subr.mxu0 0.0
        %1144 = vmatpush1.msra.mxu0 %v1138
        %1145 = vmatprep.subr.mxu0 0.0
        %1146 = vmatpush1.msra.mxu0 0.0
        %1147 = vmatprep.subr.mxu0 0.0
        %1148 = vmatpush1.msra.mxu0 0.0
        %1149 = vmatprep.subr.mxu0 0.0
        %1150 = vmatpush1.msra.mxu0 0.0
        %1151 = vmatprep.subr.mxu0 0.0
        %1152 = vmatpush1.msra.mxu0 0.0
        %1153 = vmatprep.subr.mxu0 0.0
        %1154 = vmatpush1.msra.mxu0 0.0
        %1155 = vmatprep.subr.mxu0 0.0
        %1156 = vmatpush1.msra.mxu0 0.0
        %1157 = vmatprep.subr.mxu0 0.0
        %1158 = vmatpush1.msra.mxu0 0.0
        %1159 = vmatprep.subr.mxu0 0.0
        %1160 = vmatpush1.msra.mxu0 0.0
        %1161 = vmatprep.subr.mxu0 0.0
        %1162 = vmatpush1.msra.mxu0 0.0
        %1163 = vmatprep.subr.mxu0 0.0
        %1164 = vmatpush1.msra.mxu0 0.0
        %1165 = vmatprep.subr.mxu0 0.0
        %1166 = vmatpush1.msra.mxu0 0.0
        %1167 = vmatprep.subr.mxu0 0.0
        %1168 = vmatpush1.msra.mxu0 0.0
        %1169 = vmatprep.subr.mxu0 0.0
        %1170 = vmatpush1.msra.mxu0 0.0
        %1171 = vmatprep.subr.mxu0 0.0
        %1172 = vmatpush1.msra.mxu0 0.0
        %1173 = vmatprep.subr.mxu0 0.0
        %1174 = vmatpush1.msra.mxu0 0.0
        %1175 = vmatprep.subr.mxu0 0.0
        %1176 = vmatpush1.msra.mxu0 0.0
        %1177 = vmatprep.subr.mxu0 0.0
        %1178 = vmatpush1.msra.mxu0 0.0
        %1179 = vmatprep.subr.mxu0 0.0
        %1180 = vmatpush1.msra.mxu0 0.0
        %1181 = vmatprep.subr.mxu0 0.0
        %1182 = vmatpush1.msra.mxu0 0.0
        %1183 = vmatprep.subr.mxu0 0.0
        %1184 = vmatpush1.msra.mxu0 0.0
        %1185 = vmatprep.subr.mxu0 0.0
        %1186 = vmatpush1.msra.mxu0 0.0
        %1187 = vmatprep.subr.mxu0 0.0
        %1188 = vmatpush1.msra.mxu0 0.0
        %1189 = vmatprep.subr.mxu0 0.0
        %1190 = vmatpush1.msra.mxu0 0.0
        %1191 = vmatprep.subr.mxu0 0.0
        %1192 = vmatpush1.msra.mxu0 0.0
        %1193 = vmatprep.subr.mxu0 0.0
        %1194 = vmatpush1.msra.mxu0 0.0
        %1195 = vmatprep.subr.mxu0 0.0
        %1196 = vmatpush1.msra.mxu0 0.0
        %1197 = vmatprep.subr.mxu0 0.0
        %1198 = vmatpush1.msra.mxu0 0.0
        %1199 = vmatprep.subr.mxu0 0.0
        %1200 = vmatpush1.msra.mxu0 0.0
        %1201 = vmatprep.subr.mxu0 0.0
        %1202 = vmatpush1.msra.mxu0 0.0
        %1203 = vmatprep.subr.mxu0 0.0
        %1204 = vmatpush1.msra.mxu0 0.0
        %1205 = vmatprep.subr.mxu0 0.0
        %1206 = vmatpush1.msra.mxu0 0.0
        %1207 = vmatprep.mubr.f32.mxu0 0.0
        %1208 = vmatmul.mubr.f32.gmra.mrb[0].mxu0 %v1141
        %v1209 = vpop.f32.mrb[0].mxu0
        %v1210 = vadd.f32 0.0, %v1209
        %v1211 = vpop.f32.mrb[0].mxu0
        %1212 = vdwg.mxu0
        %v1214 = vsel %vm881, %v1210, 0
        %1216 = vmatprep.subr.mxu0 0.0
        %1217 = vmatpush1.msra.mxu0 %v878
        %1218 = vmatprep.subr.mxu0 0.0
        %1219 = vmatpush1.msra.mxu0 0.0
        %1220 = vmatprep.subr.mxu0 0.0
        %1221 = vmatpush1.msra.mxu0 0.0
        %1222 = vmatprep.subr.mxu0 0.0
        %1223 = vmatpush1.msra.mxu0 0.0
        %1224 = vmatprep.subr.mxu0 0.0
        %1225 = vmatpush1.msra.mxu0 0.0
        %1226 = vmatprep.subr.mxu0 0.0
        %1227 = vmatpush1.msra.mxu0 0.0
        %1228 = vmatprep.subr.mxu0 0.0
        %1229 = vmatpush1.msra.mxu0 0.0
        %1230 = vmatprep.subr.mxu0 0.0
        %1231 = vmatpush1.msra.mxu0 0.0
        %1232 = vmatprep.subr.mxu0 0.0
        %1233 = vmatpush1.msra.mxu0 0.0
        %1234 = vmatprep.subr.mxu0 0.0
        %1235 = vmatpush1.msra.mxu0 0.0
        %1236 = vmatprep.subr.mxu0 0.0
        %1237 = vmatpush1.msra.mxu0 0.0
        %1238 = vmatprep.subr.mxu0 0.0
        %1239 = vmatpush1.msra.mxu0 0.0
        %1240 = vmatprep.subr.mxu0 0.0
        %1241 = vmatpush1.msra.mxu0 0.0
        %1242 = vmatprep.subr.mxu0 0.0
        %1243 = vmatpush1.msra.mxu0 0.0
        %1244 = vmatprep.subr.mxu0 0.0
        %1245 = vmatpush1.msra.mxu0 0.0
        %1246 = vmatprep.subr.mxu0 0.0
        %1247 = vmatpush1.msra.mxu0 0.0
        %1248 = vmatprep.subr.mxu0 0.0
        %1249 = vmatpush1.msra.mxu0 0.0
        %1250 = vmatprep.subr.mxu0 0.0
        %1251 = vmatpush1.msra.mxu0 0.0
        %1252 = vmatprep.subr.mxu0 0.0
        %1253 = vmatpush1.msra.mxu0 0.0
        %1254 = vmatprep.subr.mxu0 0.0
        %1255 = vmatpush1.msra.mxu0 0.0
        %1256 = vmatprep.subr.mxu0 0.0
        %1257 = vmatpush1.msra.mxu0 0.0
        %1258 = vmatprep.subr.mxu0 0.0
        %1259 = vmatpush1.msra.mxu0 0.0
        %1260 = vmatprep.subr.mxu0 0.0
        %1261 = vmatpush1.msra.mxu0 0.0
        %1262 = vmatprep.subr.mxu0 0.0
        %1263 = vmatpush1.msra.mxu0 0.0
        %1264 = vmatprep.subr.mxu0 0.0
        %1265 = vmatpush1.msra.mxu0 0.0
        %1266 = vmatprep.subr.mxu0 0.0
        %1267 = vmatpush1.msra.mxu0 0.0
        %1268 = vmatprep.subr.mxu0 0.0
        %1269 = vmatpush1.msra.mxu0 0.0
        %1270 = vmatprep.subr.mxu0 0.0
        %1271 = vmatpush1.msra.mxu0 0.0
        %1272 = vmatprep.subr.mxu0 0.0
        %1273 = vmatpush1.msra.mxu0 0.0
        %1274 = vmatprep.subr.mxu0 0.0
        %1275 = vmatpush1.msra.mxu0 0.0
        %1276 = vmatprep.subr.mxu0 0.0
        %1277 = vmatpush1.msra.mxu0 0.0
        %1278 = vmatprep.subr.mxu0 0.0
        %1279 = vmatpush1.msra.mxu0 0.0
        %1280 = vmatprep.mubr.f32.mxu0 0.0
        %1281 = vmatmul.mubr.f32.gmra.mrb[0].mxu0 %v1214
        %v1282 = vpop.f32.mrb[0].mxu0
        %v1283 = vadd.f32 0.0, %v1282
        %v1284 = vpop.f32.mrb[0].mxu0
        %1285 = vdwg.mxu0
        %v1287 = vsel %vm881, %v1041, 0
        %1289 = vmatprep.subr.mxu0 0.0
        %1290 = vmatpush1.msra.mxu0 %v877
        %1291 = vmatprep.subr.mxu0 0.0
        %1292 = vmatpush1.msra.mxu0 0.0
        %1293 = vmatprep.subr.mxu0 0.0
        %1294 = vmatpush1.msra.mxu0 0.0
        %1295 = vmatprep.subr.mxu0 0.0
        %1296 = vmatpush1.msra.mxu0 0.0
        %1297 = vmatprep.subr.mxu0 0.0
        %1298 = vmatpush1.msra.mxu0 0.0
        %1299 = vmatprep.subr.mxu0 0.0
        %1300 = vmatpush1.msra.mxu0 0.0
        %1301 = vmatprep.subr.mxu0 0.0
        %1302 = vmatpush1.msra.mxu0 0.0
        %1303 = vmatprep.subr.mxu0 0.0
        %1304 = vmatpush1.msra.mxu0 0.0
        %1305 = vmatprep.subr.mxu0 0.0
        %1306 = vmatpush1.msra.mxu0 0.0
        %1307 = vmatprep.subr.mxu0 0.0
        %1308 = vmatpush1.msra.mxu0 0.0
        %1309 = vmatprep.subr.mxu0 0.0
        %1310 = vmatpush1.msra.mxu0 0.0
        %1311 = vmatprep.subr.mxu0 0.0
        %1312 = vmatpush1.msra.mxu0 0.0
        %1313 = vmatprep.subr.mxu0 0.0
        %1314 = vmatpush1.msra.mxu0 0.0
        %1315 = vmatprep.subr.mxu0 0.0
        %1316 = vmatpush1.msra.mxu0 0.0
        %1317 = vmatprep.subr.mxu0 0.0
        %1318 = vmatpush1.msra.mxu0 0.0
        %1319 = vmatprep.subr.mxu0 0.0
        %1320 = vmatpush1.msra.mxu0 0.0
        %1321 = vmatprep.subr.mxu0 0.0
        %1322 = vmatpush1.msra.mxu0 0.0
        %1323 = vmatprep.subr.mxu0 0.0
        %1324 = vmatpush1.msra.mxu0 0.0
        %1325 = vmatprep.subr.mxu0 0.0
        %1326 = vmatpush1.msra.mxu0 0.0
        %1327 = vmatprep.subr.mxu0 0.0
        %1328 = vmatpush1.msra.mxu0 0.0
        %1329 = vmatprep.subr.mxu0 0.0
        %1330 = vmatpush1.msra.mxu0 0.0
        %1331 = vmatprep.subr.mxu0 0.0
        %1332 = vmatpush1.msra.mxu0 0.0
        %1333 = vmatprep.subr.mxu0 0.0
        %1334 = vmatpush1.msra.mxu0 0.0
        %1335 = vmatprep.subr.mxu0 0.0
        %1336 = vmatpush1.msra.mxu0 0.0
        %1337 = vmatprep.subr.mxu0 0.0
        %1338 = vmatpush1.msra.mxu0 0.0
        %1339 = vmatprep.subr.mxu0 0.0
        %1340 = vmatpush1.msra.mxu0 0.0
        %1341 = vmatprep.subr.mxu0 0.0
        %1342 = vmatpush1.msra.mxu0 0.0
        %1343 = vmatprep.subr.mxu0 0.0
        %1344 = vmatpush1.msra.mxu0 0.0
        %1345 = vmatprep.subr.mxu0 0.0
        %1346 = vmatpush1.msra.mxu0 0.0
        %1347 = vmatprep.subr.mxu0 0.0
        %1348 = vmatpush1.msra.mxu0 0.0
        %1349 = vmatprep.subr.mxu0 0.0
        %1350 = vmatpush1.msra.mxu0 0.0
        %1351 = vmatprep.subr.mxu0 0.0
        %1352 = vmatpush1.msra.mxu0 0.0
        %1353 = vmatprep.mubr.f32.mxu0 0.0
        %1354 = vmatmul.mubr.f32.gmra.mrb[0].mxu0 %v1287
        %v1355 = vpop.f32.mrb[0].mxu0
        %v1356 = vadd.f32 %v1283, %v1355
        %v1357 = vpop.f32.mrb[0].mxu0
        %1358 = vdwg.mxu0
        %1359 = vrot.lane.b32.xlu0 %v707, 112
        %v1360 = vpop.permute.xlu0 %1359
        %1361 = vrot.lane.b32.xlu0 %v789, 112
        %v1362 = vpop.permute.xlu0 %1361
        %v1363 = vsel %vm881, %v1360, 0
        %v1365 = vsel %vm881, %v1362, 0
        %1367 = vmatprep.subr.mxu0 0.0
        %1368 = vmatpush1.xpose.msra.mxu0 %v1365
        %1369 = vmatprep.subr.mxu0 0.0
        %1370 = vmatpush1.xpose.msra.mxu0 0.0
        %1371 = vmatprep.subr.mxu0 0.0
        %1372 = vmatpush1.xpose.msra.mxu0 0.0
        %1373 = vmatprep.subr.mxu0 0.0
        %1374 = vmatpush1.xpose.msra.mxu0 0.0
        %1375 = vmatprep.subr.mxu0 0.0
        %1376 = vmatpush1.xpose.msra.mxu0 0.0
        %1377 = vmatprep.subr.mxu0 0.0
        %1378 = vmatpush1.xpose.msra.mxu0 0.0
        %1379 = vmatprep.subr.mxu0 0.0
        %1380 = vmatpush1.xpose.msra.mxu0 0.0
        %1381 = vmatprep.subr.mxu0 0.0
        %1382 = vmatpush1.xpose.msra.mxu0 0.0
        %1383 = vmatprep.subr.mxu0 0.0
        %1384 = vmatpush1.xpose.msra.mxu0 0.0
        %1385 = vmatprep.subr.mxu0 0.0
        %1386 = vmatpush1.xpose.msra.mxu0 0.0
        %1387 = vmatprep.subr.mxu0 0.0
        %1388 = vmatpush1.xpose.msra.mxu0 0.0
        %1389 = vmatprep.subr.mxu0 0.0
        %1390 = vmatpush1.xpose.msra.mxu0 0.0
        %1391 = vmatprep.subr.mxu0 0.0
        %1392 = vmatpush1.xpose.msra.mxu0 0.0
        %1393 = vmatprep.subr.mxu0 0.0
        %1394 = vmatpush1.xpose.msra.mxu0 0.0
        %1395 = vmatprep.subr.mxu0 0.0
        %1396 = vmatpush1.xpose.msra.mxu0 0.0
        %1397 = vmatprep.subr.mxu0 0.0
        %1398 = vmatpush1.xpose.msra.mxu0 0.0
        %1399 = vmatprep.subr.mxu0 0.0
        %1400 = vmatpush1.xpose.msra.mxu0 0.0
        %1401 = vmatprep.subr.mxu0 0.0
        %1402 = vmatpush1.xpose.msra.mxu0 0.0
        %1403 = vmatprep.subr.mxu0 0.0
        %1404 = vmatpush1.xpose.msra.mxu0 0.0
        %1405 = vmatprep.subr.mxu0 0.0
        %1406 = vmatpush1.xpose.msra.mxu0 0.0
        %1407 = vmatprep.subr.mxu0 0.0
        %1408 = vmatpush1.xpose.msra.mxu0 0.0
        %1409 = vmatprep.subr.mxu0 0.0
        %1410 = vmatpush1.xpose.msra.mxu0 0.0
        %1411 = vmatprep.subr.mxu0 0.0
        %1412 = vmatpush1.xpose.msra.mxu0 0.0
        %1413 = vmatprep.subr.mxu0 0.0
        %1414 = vmatpush1.xpose.msra.mxu0 0.0
        %1415 = vmatprep.subr.mxu0 0.0
        %1416 = vmatpush1.xpose.msra.mxu0 0.0
        %1417 = vmatprep.subr.mxu0 0.0
        %1418 = vmatpush1.xpose.msra.mxu0 0.0
        %1419 = vmatprep.subr.mxu0 0.0
        %1420 = vmatpush1.xpose.msra.mxu0 0.0
        %1421 = vmatprep.subr.mxu0 0.0
        %1422 = vmatpush1.xpose.msra.mxu0 0.0
        %1423 = vmatprep.subr.mxu0 0.0
        %1424 = vmatpush1.xpose.msra.mxu0 0.0
        %1425 = vmatprep.subr.mxu0 0.0
        %1426 = vmatpush1.xpose.msra.mxu0 0.0
        %1427 = vmatprep.subr.mxu0 0.0
        %1428 = vmatpush1.xpose.msra.mxu0 0.0
        %1429 = vmatprep.subr.mxu0 0.0
        %1430 = vmatpush1.xpose.msra.mxu0 0.0
        %1431 = vmatprep.mubr.f32.mxu0 0.0
        %1432 = vmatmul.mubr.f32.gmra.mrb[0].mxu0 %v1363
        %v1433 = vpop.f32.mrb[0].mxu0
        %v1434 = vadd.f32 0.0, %v1433
        %v1435 = vpop.f32.mrb[0].mxu0
        %1436 = vdwg.mxu0
        %v1437 = vsel %vm876, -1e+09, %v1434
        %v1438 = vsel %vm881, %v1437, -inf
        %1439 = vmax.xlane.f32.xlu0 %v1438
        %v1440 = vpop.xlane.xlu0 %1439
        %v1441 = vsub.f32 %v1437, %v1440
        %v1442 = vmul.f32 %v1441, 1.442695
        %v1443 = vpow.pop %v1442
        %v1444 = vsel %vm881, %v1443, 0.0
        %1445 = vadd.xlane.f32.xlu0 %v1444
        %v1446 = vpop.xlane.xlu0 %1445
        %v1447 = vrcp.pop %v1446
        %v1448 = vmul.f32 %v1443, %v1447
        %s1449 = scalar_lea.vmem %s617, 16 [#allocation15]
        %1450 = vst.msk [vmem:[%s1449] sm:$0xff] %vm881, %v1448
        %1451 = vrot.lane.b32.xlu0 %v873, 112
        %v1452 = vpop.permute.xlu0 %1451
        %v1455 = vsel %vm881, %v1448, 0
        %1457 = vmatprep.subr.mxu0 0.0
        %1458 = vmatpush1.msra.mxu0 %v1452
        %1459 = vmatprep.subr.mxu0 0.0
        %1460 = vmatpush1.msra.mxu0 0.0
        %1461 = vmatprep.subr.mxu0 0.0
        %1462 = vmatpush1.msra.mxu0 0.0
        %1463 = vmatprep.subr.mxu0 0.0
        %1464 = vmatpush1.msra.mxu0 0.0
        %1465 = vmatprep.subr.mxu0 0.0
        %1466 = vmatpush1.msra.mxu0 0.0
        %1467 = vmatprep.subr.mxu0 0.0
        %1468 = vmatpush1.msra.mxu0 0.0
        %1469 = vmatprep.subr.mxu0 0.0
        %1470 = vmatpush1.msra.mxu0 0.0
        %1471 = vmatprep.subr.mxu0 0.0
        %1472 = vmatpush1.msra.mxu0 0.0
        %1473 = vmatprep.subr.mxu0 0.0
        %1474 = vmatpush1.msra.mxu0 0.0
        %1475 = vmatprep.subr.mxu0 0.0
        %1476 = vmatpush1.msra.mxu0 0.0
        %1477 = vmatprep.subr.mxu0 0.0
        %1478 = vmatpush1.msra.mxu0 0.0
        %1479 = vmatprep.subr.mxu0 0.0
        %1480 = vmatpush1.msra.mxu0 0.0
        %1481 = vmatprep.subr.mxu0 0.0
        %1482 = vmatpush1.msra.mxu0 0.0
        %1483 = vmatprep.subr.mxu0 0.0
        %1484 = vmatpush1.msra.mxu0 0.0
        %1485 = vmatprep.subr.mxu0 0.0
        %1486 = vmatpush1.msra.mxu0 0.0
        %1487 = vmatprep.subr.mxu0 0.0
        %1488 = vmatpush1.msra.mxu0 0.0
        %1489 = vmatprep.subr.mxu0 0.0
        %1490 = vmatpush1.msra.mxu0 0.0
        %1491 = vmatprep.subr.mxu0 0.0
        %1492 = vmatpush1.msra.mxu0 0.0
        %1493 = vmatprep.subr.mxu0 0.0
        %1494 = vmatpush1.msra.mxu0 0.0
        %1495 = vmatprep.subr.mxu0 0.0
        %1496 = vmatpush1.msra.mxu0 0.0
        %1497 = vmatprep.subr.mxu0 0.0
        %1498 = vmatpush1.msra.mxu0 0.0
        %1499 = vmatprep.subr.mxu0 0.0
        %1500 = vmatpush1.msra.mxu0 0.0
        %1501 = vmatprep.subr.mxu0 0.0
        %1502 = vmatpush1.msra.mxu0 0.0
        %1503 = vmatprep.subr.mxu0 0.0
        %1504 = vmatpush1.msra.mxu0 0.0
        %1505 = vmatprep.subr.mxu0 0.0
        %1506 = vmatpush1.msra.mxu0 0.0
        %1507 = vmatprep.subr.mxu0 0.0
        %1508 = vmatpush1.msra.mxu0 0.0
        %1509 = vmatprep.subr.mxu0 0.0
        %1510 = vmatpush1.msra.mxu0 0.0
        %1511 = vmatprep.subr.mxu0 0.0
        %1512 = vmatpush1.msra.mxu0 0.0
        %1513 = vmatprep.subr.mxu0 0.0
        %1514 = vmatpush1.msra.mxu0 0.0
        %1515 = vmatprep.subr.mxu0 0.0
        %1516 = vmatpush1.msra.mxu0 0.0
        %1517 = vmatprep.subr.mxu0 0.0
        %1518 = vmatpush1.msra.mxu0 0.0
        %1519 = vmatprep.subr.mxu0 0.0
        %1520 = vmatpush1.msra.mxu0 0.0
        %1521 = vmatprep.mubr.f32.mxu0 0.0
        %1522 = vmatmul.mubr.f32.gmra.mrb[0].mxu0 %v1455
        %v1523 = vpop.f32.mrb[0].mxu0
        %v1524 = vadd.f32 0.0, %v1523
        %v1525 = vpop.f32.mrb[0].mxu0
        %1526 = vdwg.mxu0
        %v1528 = vsel %vm881, %v1524, 0
        %1530 = vmatprep.subr.mxu0 0.0
        %1531 = vmatpush1.msra.mxu0 %v879
        %1532 = vmatprep.subr.mxu0 0.0
        %1533 = vmatpush1.msra.mxu0 0.0
        %1534 = vmatprep.subr.mxu0 0.0
        %1535 = vmatpush1.msra.mxu0 0.0
        %1536 = vmatprep.subr.mxu0 0.0
        %1537 = vmatpush1.msra.mxu0 0.0
        %1538 = vmatprep.subr.mxu0 0.0
        %1539 = vmatpush1.msra.mxu0 0.0
        %1540 = vmatprep.subr.mxu0 0.0
        %1541 = vmatpush1.msra.mxu0 0.0
        %1542 = vmatprep.subr.mxu0 0.0
        %1543 = vmatpush1.msra.mxu0 0.0
        %1544 = vmatprep.subr.mxu0 0.0
        %1545 = vmatpush1.msra.mxu0 0.0
        %1546 = vmatprep.subr.mxu0 0.0
        %1547 = vmatpush1.msra.mxu0 0.0
        %1548 = vmatprep.subr.mxu0 0.0
        %1549 = vmatpush1.msra.mxu0 0.0
        %1550 = vmatprep.subr.mxu0 0.0
        %1551 = vmatpush1.msra.mxu0 0.0
        %1552 = vmatprep.subr.mxu0 0.0
        %1553 = vmatpush1.msra.mxu0 0.0
        %1554 = vmatprep.subr.mxu0 0.0
        %1555 = vmatpush1.msra.mxu0 0.0
        %1556 = vmatprep.subr.mxu0 0.0
        %1557 = vmatpush1.msra.mxu0 0.0
        %1558 = vmatprep.subr.mxu0 0.0
        %1559 = vmatpush1.msra.mxu0 0.0
        %1560 = vmatprep.subr.mxu0 0.0
        %1561 = vmatpush1.msra.mxu0 0.0
        %1562 = vmatprep.subr.mxu0 0.0
        %1563 = vmatpush1.msra.mxu0 0.0
        %1564 = vmatprep.subr.mxu0 0.0
        %1565 = vmatpush1.msra.mxu0 0.0
        %1566 = vmatprep.subr.mxu0 0.0
        %1567 = vmatpush1.msra.mxu0 0.0
        %1568 = vmatprep.subr.mxu0 0.0
        %1569 = vmatpush1.msra.mxu0 0.0
        %1570 = vmatprep.subr.mxu0 0.0
        %1571 = vmatpush1.msra.mxu0 0.0
        %1572 = vmatprep.subr.mxu0 0.0
        %1573 = vmatpush1.msra.mxu0 0.0
        %1574 = vmatprep.subr.mxu0 0.0
        %1575 = vmatpush1.msra.mxu0 0.0
        %1576 = vmatprep.subr.mxu0 0.0
        %1577 = vmatpush1.msra.mxu0 0.0
        %1578 = vmatprep.subr.mxu0 0.0
        %1579 = vmatpush1.msra.mxu0 0.0
        %1580 = vmatprep.subr.mxu0 0.0
        %1581 = vmatpush1.msra.mxu0 0.0
        %1582 = vmatprep.subr.mxu0 0.0
        %1583 = vmatpush1.msra.mxu0 0.0
        %1584 = vmatprep.subr.mxu0 0.0
        %1585 = vmatpush1.msra.mxu0 0.0
        %1586 = vmatprep.subr.mxu0 0.0
        %1587 = vmatpush1.msra.mxu0 0.0
        %1588 = vmatprep.subr.mxu0 0.0
        %1589 = vmatpush1.msra.mxu0 0.0
        %1590 = vmatprep.subr.mxu0 0.0
        %1591 = vmatpush1.msra.mxu0 0.0
        %1592 = vmatprep.subr.mxu0 0.0
        %1593 = vmatpush1.msra.mxu0 0.0
        %1594 = vmatprep.mubr.f32.mxu0 0.0
        %1595 = vmatmul.mubr.f32.gmra.mrb[0].mxu0 %v1528
        %v1596 = vpop.f32.mrb[0].mxu0
        %v1597 = vadd.f32 0.0, %v1596
        %v1598 = vpop.f32.mrb[0].mxu0
        %1599 = vdwg.mxu0
        %v1600 = vadd.f32 %v1356, %v1597
        %1601 = vrot.lane.b32.xlu0 %v707, 104
        %v1602 = vpop.permute.xlu0 %1601
        %1603 = vrot.lane.b32.xlu0 %v789, 104
        %v1604 = vpop.permute.xlu0 %1603
        %v1605 = vsel %vm881, %v1602, 0
        %v1607 = vsel %vm881, %v1604, 0
        %1609 = vmatprep.subr.mxu0 0.0
        %1610 = vmatpush1.xpose.msra.mxu0 %v1607
        %1611 = vmatprep.subr.mxu0 0.0
        %1612 = vmatpush1.xpose.msra.mxu0 0.0
        %1613 = vmatprep.subr.mxu0 0.0
        %1614 = vmatpush1.xpose.msra.mxu0 0.0
        %1615 = vmatprep.subr.mxu0 0.0
        %1616 = vmatpush1.xpose.msra.mxu0 0.0
        %1617 = vmatprep.subr.mxu0 0.0
        %1618 = vmatpush1.xpose.msra.mxu0 0.0
        %1619 = vmatprep.subr.mxu0 0.0
        %1620 = vmatpush1.xpose.msra.mxu0 0.0
        %1621 = vmatprep.subr.mxu0 0.0
        %1622 = vmatpush1.xpose.msra.mxu0 0.0
        %1623 = vmatprep.subr.mxu0 0.0
        %1624 = vmatpush1.xpose.msra.mxu0 0.0
        %1625 = vmatprep.subr.mxu0 0.0
        %1626 = vmatpush1.xpose.msra.mxu0 0.0
        %1627 = vmatprep.subr.mxu0 0.0
        %1628 = vmatpush1.xpose.msra.mxu0 0.0
        %1629 = vmatprep.subr.mxu0 0.0
        %1630 = vmatpush1.xpose.msra.mxu0 0.0
        %1631 = vmatprep.subr.mxu0 0.0
        %1632 = vmatpush1.xpose.msra.mxu0 0.0
        %1633 = vmatprep.subr.mxu0 0.0
        %1634 = vmatpush1.xpose.msra.mxu0 0.0
        %1635 = vmatprep.subr.mxu0 0.0
        %1636 = vmatpush1.xpose.msra.mxu0 0.0
        %1637 = vmatprep.subr.mxu0 0.0
        %1638 = vmatpush1.xpose.msra.mxu0 0.0
        %1639 = vmatprep.subr.mxu0 0.0
        %1640 = vmatpush1.xpose.msra.mxu0 0.0
        %1641 = vmatprep.subr.mxu0 0.0
        %1642 = vmatpush1.xpose.msra.mxu0 0.0
        %1643 = vmatprep.subr.mxu0 0.0
        %1644 = vmatpush1.xpose.msra.mxu0 0.0
        %1645 = vmatprep.subr.mxu0 0.0
        %1646 = vmatpush1.xpose.msra.mxu0 0.0
        %1647 = vmatprep.subr.mxu0 0.0
        %1648 = vmatpush1.xpose.msra.mxu0 0.0
        %1649 = vmatprep.subr.mxu0 0.0
        %1650 = vmatpush1.xpose.msra.mxu0 0.0
        %1651 = vmatprep.subr.mxu0 0.0
        %1652 = vmatpush1.xpose.msra.mxu0 0.0
        %1653 = vmatprep.subr.mxu0 0.0
        %1654 = vmatpush1.xpose.msra.mxu0 0.0
        %1655 = vmatprep.subr.mxu0 0.0
        %1656 = vmatpush1.xpose.msra.mxu0 0.0
        %1657 = vmatprep.subr.mxu0 0.0
        %1658 = vmatpush1.xpose.msra.mxu0 0.0
        %1659 = vmatprep.subr.mxu0 0.0
        %1660 = vmatpush1.xpose.msra.mxu0 0.0
        %1661 = vmatprep.subr.mxu0 0.0
        %1662 = vmatpush1.xpose.msra.mxu0 0.0
        %1663 = vmatprep.subr.mxu0 0.0
        %1664 = vmatpush1.xpose.msra.mxu0 0.0
        %1665 = vmatprep.subr.mxu0 0.0
        %1666 = vmatpush1.xpose.msra.mxu0 0.0
        %1667 = vmatprep.subr.mxu0 0.0
        %1668 = vmatpush1.xpose.msra.mxu0 0.0
        %1669 = vmatprep.subr.mxu0 0.0
        %1670 = vmatpush1.xpose.msra.mxu0 0.0
        %1671 = vmatprep.subr.mxu0 0.0
        %1672 = vmatpush1.xpose.msra.mxu0 0.0
        %1673 = vmatprep.mubr.f32.mxu0 0.0
        %1674 = vmatmul.mubr.f32.gmra.mrb[0].mxu0 %v1605
        %v1675 = vpop.f32.mrb[0].mxu0
        %v1676 = vadd.f32 0.0, %v1675
        %v1677 = vpop.f32.mrb[0].mxu0
        %1678 = vdwg.mxu0
        %v1679 = vsel %vm876, -1e+09, %v1676
        %v1680 = vsel %vm881, %v1679, -inf
        %1681 = vmax.xlane.f32.xlu0 %v1680
        %v1682 = vpop.xlane.xlu0 %1681
        %v1683 = vsub.f32 %v1679, %v1682
        %v1684 = vmul.f32 %v1683, 1.442695
        %v1685 = vpow.pop %v1684
        %v1686 = vsel %vm881, %v1685, 0.0
        %1687 = vadd.xlane.f32.xlu0 %v1686
        %v1688 = vpop.xlane.xlu0 %1687
        %v1689 = vrcp.pop %v1688
        %v1690 = vmul.f32 %v1685, %v1689
        %s1691 = scalar_lea.vmem %s617, 24 [#allocation15]
        %1692 = vst.msk [vmem:[%s1691] sm:$0xff] %vm881, %v1690
        %1693 = vrot.lane.b32.xlu0 %v873, 104
        %v1694 = vpop.permute.xlu0 %1693
        %v1697 = vsel %vm881, %v1690, 0
        %1699 = vmatprep.subr.mxu0 0.0
        %1700 = vmatpush1.msra.mxu0 %v1694
        %1701 = vmatprep.subr.mxu0 0.0
        %1702 = vmatpush1.msra.mxu0 0.0
        %1703 = vmatprep.subr.mxu0 0.0
        %1704 = vmatpush1.msra.mxu0 0.0
        %1705 = vmatprep.subr.mxu0 0.0
        %1706 = vmatpush1.msra.mxu0 0.0
        %1707 = vmatprep.subr.mxu0 0.0
        %1708 = vmatpush1.msra.mxu0 0.0
        %1709 = vmatprep.subr.mxu0 0.0
        %1710 = vmatpush1.msra.mxu0 0.0
        %1711 = vmatprep.subr.mxu0 0.0
        %1712 = vmatpush1.msra.mxu0 0.0
        %1713 = vmatprep.subr.mxu0 0.0
        %1714 = vmatpush1.msra.mxu0 0.0
        %1715 = vmatprep.subr.mxu0 0.0
        %1716 = vmatpush1.msra.mxu0 0.0
        %1717 = vmatprep.subr.mxu0 0.0
        %1718 = vmatpush1.msra.mxu0 0.0
        %1719 = vmatprep.subr.mxu0 0.0
        %1720 = vmatpush1.msra.mxu0 0.0
        %1721 = vmatprep.subr.mxu0 0.0
        %1722 = vmatpush1.msra.mxu0 0.0
        %1723 = vmatprep.subr.mxu0 0.0
        %1724 = vmatpush1.msra.mxu0 0.0
        %1725 = vmatprep.subr.mxu0 0.0
        %1726 = vmatpush1.msra.mxu0 0.0
        %1727 = vmatprep.subr.mxu0 0.0
        %1728 = vmatpush1.msra.mxu0 0.0
        %1729 = vmatprep.subr.mxu0 0.0
        %1730 = vmatpush1.msra.mxu0 0.0
        %1731 = vmatprep.subr.mxu0 0.0
        %1732 = vmatpush1.msra.mxu0 0.0
        %1733 = vmatprep.subr.mxu0 0.0
        %1734 = vmatpush1.msra.mxu0 0.0
        %1735 = vmatprep.subr.mxu0 0.0
        %1736 = vmatpush1.msra.mxu0 0.0
        %1737 = vmatprep.subr.mxu0 0.0
        %1738 = vmatpush1.msra.mxu0 0.0
        %1739 = vmatprep.subr.mxu0 0.0
        %1740 = vmatpush1.msra.mxu0 0.0
        %1741 = vmatprep.subr.mxu0 0.0
        %1742 = vmatpush1.msra.mxu0 0.0
        %1743 = vmatprep.subr.mxu0 0.0
        %1744 = vmatpush1.msra.mxu0 0.0
        %1745 = vmatprep.subr.mxu0 0.0
        %1746 = vmatpush1.msra.mxu0 0.0
        %1747 = vmatprep.subr.mxu0 0.0
        %1748 = vmatpush1.msra.mxu0 0.0
        %1749 = vmatprep.subr.mxu0 0.0
        %1750 = vmatpush1.msra.mxu0 0.0
        %1751 = vmatprep.subr.mxu0 0.0
        %1752 = vmatpush1.msra.mxu0 0.0
        %1753 = vmatprep.subr.mxu0 0.0
        %1754 = vmatpush1.msra.mxu0 0.0
        %1755 = vmatprep.subr.mxu0 0.0
        %1756 = vmatpush1.msra.mxu0 0.0
        %1757 = vmatprep.subr.mxu0 0.0
        %1758 = vmatpush1.msra.mxu0 0.0
        %1759 = vmatprep.subr.mxu0 0.0
        %1760 = vmatpush1.msra.mxu0 0.0
        %1761 = vmatprep.subr.mxu0 0.0
        %1762 = vmatpush1.msra.mxu0 0.0
        %1763 = vmatprep.mubr.f32.mxu0 0.0
        %1764 = vmatmul.mubr.f32.gmra.mrb[0].mxu0 %v1697
        %v1765 = vpop.f32.mrb[0].mxu0
        %v1766 = vadd.f32 0.0, %v1765
        %v1767 = vpop.f32.mrb[0].mxu0
        %1768 = vdwg.mxu0
        %v1770 = vsel %vm881, %v1766, 0
        %1772 = vmatprep.subr.mxu0 0.0
        %1773 = vmatpush1.msra.mxu0 %v880
        %1774 = vmatprep.subr.mxu0 0.0
        %1775 = vmatpush1.msra.mxu0 0.0
        %1776 = vmatprep.subr.mxu0 0.0
        %1777 = vmatpush1.msra.mxu0 0.0
        %1778 = vmatprep.subr.mxu0 0.0
        %1779 = vmatpush1.msra.mxu0 0.0
        %1780 = vmatprep.subr.mxu0 0.0
        %1781 = vmatpush1.msra.mxu0 0.0
        %1782 = vmatprep.subr.mxu0 0.0
        %1783 = vmatpush1.msra.mxu0 0.0
        %1784 = vmatprep.subr.mxu0 0.0
        %1785 = vmatpush1.msra.mxu0 0.0
        %1786 = vmatprep.subr.mxu0 0.0
        %1787 = vmatpush1.msra.mxu0 0.0
        %1788 = vmatprep.subr.mxu0 0.0
        %1789 = vmatpush1.msra.mxu0 0.0
        %1790 = vmatprep.subr.mxu0 0.0
        %1791 = vmatpush1.msra.mxu0 0.0
        %1792 = vmatprep.subr.mxu0 0.0
        %1793 = vmatpush1.msra.mxu0 0.0
        %1794 = vmatprep.subr.mxu0 0.0
        %1795 = vmatpush1.msra.mxu0 0.0
        %1796 = vmatprep.subr.mxu0 0.0
        %1797 = vmatpush1.msra.mxu0 0.0
        %1798 = vmatprep.subr.mxu0 0.0
        %1799 = vmatpush1.msra.mxu0 0.0
        %1800 = vmatprep.subr.mxu0 0.0
        %1801 = vmatpush1.msra.mxu0 0.0
        %1802 = vmatprep.subr.mxu0 0.0
        %1803 = vmatpush1.msra.mxu0 0.0
        %1804 = vmatprep.subr.mxu0 0.0
        %1805 = vmatpush1.msra.mxu0 0.0
        %1806 = vmatprep.subr.mxu0 0.0
        %1807 = vmatpush1.msra.mxu0 0.0
        %1808 = vmatprep.subr.mxu0 0.0
        %1809 = vmatpush1.msra.mxu0 0.0
        %1810 = vmatprep.subr.mxu0 0.0
        %1811 = vmatpush1.msra.mxu0 0.0
        %1812 = vmatprep.subr.mxu0 0.0
        %1813 = vmatpush1.msra.mxu0 0.0
        %1814 = vmatprep.subr.mxu0 0.0
        %1815 = vmatpush1.msra.mxu0 0.0
        %1816 = vmatprep.subr.mxu0 0.0
        %1817 = vmatpush1.msra.mxu0 0.0
        %1818 = vmatprep.subr.mxu0 0.0
        %1819 = vmatpush1.msra.mxu0 0.0
        %1820 = vmatprep.subr.mxu0 0.0
        %1821 = vmatpush1.msra.mxu0 0.0
        %1822 = vmatprep.subr.mxu0 0.0
        %1823 = vmatpush1.msra.mxu0 0.0
        %1824 = vmatprep.subr.mxu0 0.0
        %1825 = vmatpush1.msra.mxu0 0.0
        %1826 = vmatprep.subr.mxu0 0.0
        %1827 = vmatpush1.msra.mxu0 0.0
        %1828 = vmatprep.subr.mxu0 0.0
        %1829 = vmatpush1.msra.mxu0 0.0
        %1830 = vmatprep.subr.mxu0 0.0
        %1831 = vmatpush1.msra.mxu0 0.0
        %1832 = vmatprep.subr.mxu0 0.0
        %1833 = vmatpush1.msra.mxu0 0.0
        %1834 = vmatprep.subr.mxu0 0.0
        %1835 = vmatpush1.msra.mxu0 0.0
        %1836 = vmatprep.mubr.f32.mxu0 0.0
        %1837 = vmatmul.mubr.f32.gmra.mrb[0].mxu0 %v1770
        %v1838 = vpop.f32.mrb[0].mxu0
        %v1839 = vadd.f32 0.0, %v1838
        %v1840 = vpop.f32.mrb[0].mxu0
        %1841 = vdwg.mxu0
        %v1842 = vadd.f32 %v1600, %v1839
        %v1843 = vld [vmem:[%s11] sm:$0x1]
        %v1845 = vlaneseq
        %v1846 = vshrl.u32 %v1845, 7
        %v1847 = vsub.s32 0, %v1846
        %v1848 = vrot.slane %v1843, %v1847
        %v1850 = vadd.f32 %v1842, %v1848
        %1851 = vst.msk [vmem:[%s610] sm:$0xff] %vm633, %v1850
        %s1852 = sand.u32 %s321, 1
        %s1853 = scalar_lea.sflag [#allocation4], %s1852
        %s1854 = sand.u32 %s321, 1
        %s1855 = smul.addr %s1854, 8
        %s1856 = scalar_lea.vmem [#allocation14], %s1855
        %s1857 = sand.u32 %s347, 1
        %s1858 = scalar_lea.sflag [#allocation16], %s1857
        %s1859 = sand.u32 %s347, 1
        %s1860 = smul.addr %s1859, 32
        %s1861 = scalar_lea.vmem [#allocation15], %s1860
        // Predicated region
        $region97: #{tpu_custom_call.1} parent=67 // pred_check
          %p1862 = pneg %p331
        $region98: #{tpu_custom_call.1} parent=67 // pred_check_branch
          %1864 = sbr.rel (%p1862) target = $region100
        $region99: #{tpu_custom_call.1} parent=67 // pred_region
          %s1866 = ssub.s32 128, 128
          %1867 = vsyncadd %s1853, %s1866
          %s1868 = smul.addr %s41, 128
          %s1869 = scalar_lea.hbm %s12, %s1868
          %s1871 = sshll.u32 %s1856, 4
          %s1872 = int_to_ptr.vmem [resolvable:$true] %s1871
          %1874 = dma.vmem_to_hbm [thread:$0]  %s1872, 128, %s1869, %s1853
        $region100: #{tpu_custom_call.1} parent=67 // pred_fallthru
          _
        // Predicated region
        $region101: #{tpu_custom_call.1} parent=67 // pred_check
          %p1875 = pneg %p357
        $region102: #{tpu_custom_call.1} parent=67 // pred_check_branch
          %1877 = sbr.rel (%p1875) target = $region104
        $region103: #{tpu_custom_call.1} parent=67 // pred_region
          %s1879 = ssub.s32 512, 512
          %1880 = vsyncadd %s1858, %s1879
          %s1881 = smul.addr %s41, 4
          %s1882 = smul.addr %s1881, 128
          %s1883 = scalar_lea.hbm %s13, %s1882
          %s1884 = sshll.u32 %s1861, 4
          %s1885 = int_to_ptr.vmem [resolvable:$true] %s1884
          %1890 = dma.vmem_to_hbm [thread:$0]  %s1885, 512, %s1883, %s1858, 128, 128, 8
        $region104: #{tpu_custom_call.1} parent=67 // pred_fallthru
          _
      $region68: #{tpu_custom_call.1} parent=5 // pred_fallthru
        _
      %p1891 = scmp.le.s32.totalorder 2, %s36
      // Predicated region
      $region105: #{tpu_custom_call.1} parent=5 // pred_check
        %p1892 = pneg %p1891
      $region106: #{tpu_custom_call.1} parent=5 // pred_check_branch
        %1894 = sbr.rel (%p1892) target = $region108
      $region107: #{tpu_custom_call.1} parent=5 // pred_region
        %s1895 = ssub.s32 %s36, 2
        // Predicated region
        $region109: #{tpu_custom_call.1} parent=107 // pred_check
          %p1896 = pneg %p337
        $region110: #{tpu_custom_call.1} parent=107 // pred_check_branch
          %1898 = sbr.rel (%p1896) target = $region112
        $region111: #{tpu_custom_call.1} parent=107 // pred_region
          %s1899 = sand.u32 %s322, 1
          %s1900 = scalar_lea.sflag [#allocation4], %s1899
          %s1901 = sand.u32 %s322, 1
          %s1902 = smul.addr %s1901, 8
          %s1903 = scalar_lea.vmem [#allocation14], %s1902
          %1904 = dma.done %s1900, 128
        $region112: #{tpu_custom_call.1} parent=107 // pred_fallthru
          _
        // Predicated region
        $region113: #{tpu_custom_call.1} parent=107 // pred_check
          %p1905 = pneg %p363
        $region114: #{tpu_custom_call.1} parent=107 // pred_check_branch
          %1907 = sbr.rel (%p1905) target = $region116
        $region115: #{tpu_custom_call.1} parent=107 // pred_region
          %s1908 = sand.u32 %s348, 1
          %s1909 = scalar_lea.sflag [#allocation16], %s1908
          %s1910 = sand.u32 %s348, 1
          %s1911 = smul.addr %s1910, 32
          %s1912 = scalar_lea.vmem [#allocation15], %s1911
          %1913 = dma.done %s1909, 512
        $region116: #{tpu_custom_call.1} parent=107 // pred_fallthru
          _
      $region108: #{tpu_custom_call.1} parent=5 // pred_fallthru
        _
    $region6: #{tpu_custom_call.1} parent=1 // loop_footer
      %s40 = sadd.s32 1, %s36
    $region7: #{tpu_custom_call.1} parent=1 // loop_footer_branch
      %35 = sbr.rel target = $region3
    $region8: #{tpu_custom_call.1} parent=1 // loop_exit
      _
    %1914 = vsyncpa [#allocation3], 1
    %s1915 = scalar_lea.sflag [#allocation3], 1
    %1916 = vsyncpa %s1915, 1
    %1917 = vsyncpa [#allocation6], 1
    %s1918 = scalar_lea.sflag [#allocation6], 1
    %1919 = vsyncpa %s1918, 1
    %1920 = vsyncpa [#allocation9], 1
    %s1921 = scalar_lea.sflag [#allocation9], 1
    %1922 = vsyncpa %s1921, 1
    %1923 = vsyncpa [#allocation12], 1
    %1924 = vsyncpa [#allocation4], 1
    %s1925 = scalar_lea.sflag [#allocation4], 1
    %1926 = vsyncpa %s1925, 1
    %1927 = vsyncpa [#allocation16], 1
    %s1928 = scalar_lea.sflag [#allocation16], 1
    %1929 = vsyncpa %s1928, 1

</llo_original>
